<compile_context>
chip_gen: v7x
topology: tpu7x:2x2x1
jax: 0.10.0
libtpu: 0.0.40
codegen_flags: <defaults>
</compile_context>

<pallas_src>
import jax
import jax.numpy as jnp
from jax.experimental import pallas as pl
from jax.experimental.pallas import tpu as pltpu

N_SUMS = 22

# index layout of the per-(split, batch) partial-sum vector produced by the kernel
(S_SOLC_LP, S_SOLC_P, S_SOLC_L,
 S_TPC_LP, S_TPC_P, S_TPC_L,
 S_SOL_DSUM, S_SOL_DMASK,
 S_SOL_LEN, S_SOL_ANG, S_SOL_LAMASK,
 S_JUNC_LP, S_JUNC_P, S_JUNC_L,
 S_LINE_LP, S_LINE_P, S_LINE_L,
 S_TP_DSUM, S_TP_DMASK,
 S_TP_LEN, S_TP_ANG, S_TP_LAMASK) = range(N_SUMS)

LOSS_W = {
    'tp_center_loss': 10.0, 'tp_displacement_loss': 1.0, 'tp_len_loss': 1.0,
    'tp_angle_loss': 1.0, 'tp_match_loss': 1.0, 'tp_centerness_loss': 1.0,
    'sol_center_loss': 1.0, 'sol_displacement_loss': 1.0, 'sol_len_loss': 1.0,
    'sol_angle_loss': 1.0, 'sol_match_loss': 1.0, 'sol_centerness_loss': 1.0,
    'line_seg_loss': 1.0, 'junc_seg_loss': 1.0,
}


def _bce_logits(x, y):
    # numerically-stable binary_cross_entropy_with_logits (reduction='none')
    return jnp.maximum(x, 0.0) - x * y + jnp.log(1.0 + jnp.exp(-jnp.abs(x)))


def _smooth_l1(a, b):
    d = a - b
    ad = jnp.abs(d)
    return jnp.where(ad < 1.0, 0.5 * d * d, ad - 0.5)


def _loss_sums_kernel(pred_ref, gt_ref, out_ref,
                      accA_lp, accA_p, accA_l, accA_misc,
                      accB_lp, accB_p, accB_l, accB_misc):
    # pred_ref / gt_ref: (16, CHUNK) tile, native dtype.
    # out_ref: (1, 1, 1, N_SUMS) f32, resident across the chunk grid axis; written once.
    # acc*_lp/p/l: (8,1) per-half row accumulators; acc*_misc: (4,1) [dsum,dcnt,len,ang].
    c = pl.program_id(2)

    @pl.when(c == 0)
    def _init():
        for r in (accA_lp, accA_p, accA_l, accA_misc,
                  accB_lp, accB_p, accB_l, accB_misc):
            r[...] = jnp.zeros_like(r)

    def half_sums(lo, disp_lo, la_lo):
        # Load one aligned 8-row half once (dense sublanes); compute everything on it.
        p = pred_ref[lo:lo + 8, :].astype(jnp.float32)
        g = gt_ref[lo:lo + 8, :].astype(jnp.float32)

        # --- BCE-with-logits on all 8 rows (same vreg count as 1 row) ---
        posf = (g != 0.0).astype(jnp.float32)
        l = _bce_logits(p, g)
        rs_lp = jnp.sum(l * posf, axis=1, keepdims=True)   # (8,1) sum(l*pos) per row
        rs_p = jnp.sum(posf, axis=1, keepdims=True)         # (8,1) pos count per row
        rs_l = jnp.sum(l, axis=1, keepdims=True)            # (8,1) total l per row

        # --- displacement loss partials (4 rows starting at disp_lo) ---
        # The channel swap (x0y0<->x1y1) is realized by cross-pairing the two 2-row
        # halves; no concat / roll / relayout needed.
        pa = p[disp_lo:disp_lo + 2]
        pb = p[disp_lo + 2:disp_lo + 4]
        ga = g[disp_lo:disp_lo + 2]
        gb = g[disp_lo + 2:disp_lo + 4]
        absum = (jnp.sum(jnp.abs(ga), axis=0, keepdims=True)
                 + jnp.sum(jnp.abs(gb), axis=0, keepdims=True))
        dmask = (absum != 0.0).astype(jnp.float32)                       # (1,CH)
        l1 = jnp.sum(_smooth_l1(pa, ga) + _smooth_l1(pb, gb), axis=0, keepdims=True)
        l2 = jnp.sum(_smooth_l1(pb, ga) + _smooth_l1(pa, gb), axis=0, keepdims=True)
        dsum = jnp.sum(jnp.minimum(l1, l2) * dmask, axis=1, keepdims=True)  # (1,1)
        dcnt = jnp.sum(dmask, axis=1, keepdims=True)                        # (1,1)

        # --- len / angle partials (2 rows starting at la_lo; mask = gt_len != 0) ---
        sl = _smooth_l1(jax.nn.sigmoid(p[la_lo:la_lo + 2]), g[la_lo:la_lo + 2])
        lamask = (g[la_lo:la_lo + 1] != 0.0).astype(jnp.float32)            # (1,CH)
        rs_la = jnp.sum(sl * lamask, axis=1, keepdims=True)                 # (2,1)

        misc = jnp.concatenate([dsum, dcnt, rs_la], axis=0)                 # (4,1)
        return rs_lp, rs_p, rs_l, misc

    # half A: channels 0..7  (sol_center=0, sol_disp=1..4, sol_len=5, sol_angle=6, tp_center=7)
    a_lp, a_p, a_l, a_misc = half_sums(0, disp_lo=1, la_lo=5)
    # half B: channels 8..15 (tp_disp=8..11, tp_len=12, tp_angle=13, junc=14, line=15)
    b_lp, b_p, b_l, b_misc = half_sums(8, disp_lo=0, la_lo=4)

    # Per-chunk work ends with 8 tiny accumulator updates (packing is deferred).
    accA_lp[...] += a_lp
    accA_p[...] += a_p
    accA_l[...] += a_l
    accA_misc[...] += a_misc
    accB_lp[...] += b_lp
    accB_p[...] += b_p
    accB_l[...] += b_l
    accB_misc[...] += b_misc

    @pl.when(c == pl.num_programs(2) - 1)
    def _finalize():
        pieces = [
            accA_lp[0:1], accA_p[0:1], accA_l[0:1],        # sol center   (0..2)
            accA_lp[7:8], accA_p[7:8], accA_l[7:8],        # tp center    (3..5)
            accA_misc[0:1], accA_misc[1:2],                # sol disp     (6,7)
            accA_misc[2:3], accA_misc[3:4], accA_p[5:6],   # sol len/ang  (8..10)
            accB_lp[6:7], accB_p[6:7], accB_l[6:7],        # junc seg     (11..13)
            accB_lp[7:8], accB_p[7:8], accB_l[7:8],        # line seg     (14..16)
            accB_misc[0:1], accB_misc[1:2],                # tp disp      (17,18)
            accB_misc[2:3], accB_misc[3:4], accB_p[4:5],   # tp len/ang   (19..21)
        ]
        lane = jax.lax.broadcasted_iota(jnp.int32, (1, N_SUMS), 1)
        row = jnp.zeros((1, N_SUMS), jnp.float32)
        for i, piece in enumerate(pieces):
            row = row + jnp.where(lane == i, piece, 0.0)
        out_ref[...] = row.reshape(1, 1, 1, N_SUMS)


def _vmem_capacity_bytes():
    try:
        return int(pltpu.get_tpu_info().vmem_capacity_bytes)
    except Exception:
        return 64 * 1024 * 1024   # conservative per-core VMEM (v7x)


def _default_max_chunk(dtype):
    # generation-aware cap: inputs take 2 arrays x 2 pipeline buffers x 16 ch x chunk
    # x itemsize; keep that under ~1/4 of per-core VMEM so compiler scratch / spills
    # have headroom (64 MiB/TC on v7x -> 65536 f32 lanes, 128 MiB on v5e/v6e -> 131072).
    itemsize = jnp.dtype(dtype).itemsize
    budget = _vmem_capacity_bytes() // 4
    chunk = budget // (2 * 2 * 16 * itemsize)
    return max(128, (chunk // 128) * 128)


def _pick_chunk(hw, max_chunk):
    if hw <= max_chunk:
        return hw
    c = (max_chunk // 128) * 128
    while c >= 128:
        if hw % c == 0:
            return c          # largest 128-multiple divisor of hw that is <= cap
        c -= 128
    # TODO(synk): HW has no 128-multiple divisor <= cap; fall back to one full-width
    # block (correct, but can exceed the VMEM budget for huge ragged resolutions --
    # pad HW to a 128 multiple upstream if that case matters).
    return hw


def line_segment_loss_sums(preds, gts, max_chunk=None, buffer_count=None):
    B, C, H, W = preds.shape
    assert C == 16, "LineSegmentLoss expects 16-channel TP/SOL maps"
    HW = H * W
    if max_chunk is None:
        max_chunk = _default_max_chunk(preds.dtype)
    chunk = _pick_chunk(HW, max_chunk)
    n_chunks = HW // chunk
    # Split the chunk range across a leading parallel axis so both v7x TensorCores
    # get work even when B is 1 or odd (no-op on single-TC v5e / v6e).
    P = 2 if (n_chunks >= 2 and n_chunks % 2 == 0) else 1
    n_per = n_chunks // P

    preds_r = preds.reshape(B, C, HW)   # native dtype, no f32 copy in the glue
    gts_r = gts.reshape(B, C, HW)

    itemsize = jnp.dtype(preds.dtype).itemsize
    in_bytes = 2 * 2 * C * chunk * itemsize          # 2 inputs x 2 pipeline buffers
    vmem_limit = int(min(max(32 << 20, 3 * in_bytes),
                         max(32 << 20, _vmem_capacity_bytes() - (16 << 20))))

    spec_kwargs = {}
    if buffer_count is not None:
        # extra pipelining depth if strided-DMA latency is exposed (e.g. on v5e)
        spec_kwargs["pipeline_mode"] = pl.Buffered(buffer_count)
    in_spec = pl.BlockSpec((None, C, chunk),
                           lambda p, b, c: (b, 0, p * n_per + c), **spec_kwargs)

    out = pl.pallas_call(
        _loss_sums_kernel,
        out_shape=jax.ShapeDtypeStruct((P, B, 1, N_SUMS), jnp.float32),
        grid=(P, B, n_per),
        in_specs=[in_spec, in_spec],
        out_specs=pl.BlockSpec((1, 1, 1, N_SUMS), lambda p, b, c: (p, b, 0, 0)),
        scratch_shapes=[
            pltpu.VMEM((8, 1), jnp.float32), pltpu.VMEM((8, 1), jnp.float32),
            pltpu.VMEM((8, 1), jnp.float32), pltpu.VMEM((4, 1), jnp.float32),
            pltpu.VMEM((8, 1), jnp.float32), pltpu.VMEM((8, 1), jnp.float32),
            pltpu.VMEM((8, 1), jnp.float32), pltpu.VMEM((4, 1), jnp.float32),
        ],
        compiler_params=pltpu.CompilerParams(
            dimension_semantics=("parallel", "parallel", "arbitrary"),
            vmem_limit_bytes=vmem_limit),
    )(preds_r, gts_r)
    # tree-reduce the per-(split, batch) partials in the glue
    return jnp.sum(out, axis=(0, 1, 2))   # (N_SUMS,)


def line_segment_loss(preds, gts, with_sol_loss=True, max_chunk=None, buffer_count=None):
    """Forward of LineSegmentLoss (with_match_loss=False, with_focal_loss=False)."""
    B, C, H, W = preds.shape
    total_px = jnp.float32(B * H * W)
    s = line_segment_loss_sums(preds, gts, max_chunk=max_chunk, buffer_count=buffer_count)

    def wbce(i_lp, i_p, i_l, pos_w, neg_w):
        pos_sum, pos_cnt, tot = s[i_lp], s[i_p], s[i_l]
        neg_sum = tot - pos_sum            # algebraic negative branch
        neg_cnt = total_px - pos_cnt
        # NOTE: like the PyTorch reference, this produces NaN if a channel has no
        # positive pixels in the whole batch; guard with jnp.maximum(cnt, 1) if needed.
        return pos_w * pos_sum / pos_cnt + neg_w * neg_sum / neg_cnt

    loss_dict = {
        'line_seg_loss': wbce(S_LINE_LP, S_LINE_P, S_LINE_L, 1.0, 1.0),
        'junc_seg_loss': wbce(S_JUNC_LP, S_JUNC_P, S_JUNC_L, 1.0, 30.0),
    }
    if with_sol_loss:
        loss_dict.update({
            'sol_center_loss': wbce(S_SOLC_LP, S_SOLC_P, S_SOLC_L, 1.0, 30.0),
            'sol_displacement_loss': s[S_SOL_DSUM] / s[S_SOL_DMASK],
            'sol_len_loss': s[S_SOL_LEN] / s[S_SOL_LAMASK],
            'sol_angle_loss': s[S_SOL_ANG] / s[S_SOL_LAMASK],
            'sol_match_loss': 0.0,   # with_match_loss=False
        })
    loss_dict.update({
        'tp_center_loss': wbce(S_TPC_LP, S_TPC_P, S_TPC_L, 1.0, 30.0),
        'tp_displacement_loss': s[S_TP_DSUM] / s[S_TP_DMASK],
        'tp_len_loss': s[S_TP_LEN] / s[S_TP_LAMASK],
        'tp_angle_loss': s[S_TP_ANG] / s[S_TP_LAMASK],
        'tp_match_loss': 0.0,        # with_match_loss=False
        'tp_match_ratio': 0.0,
    })
    # TODO(synk): matching loss (deccode_lines_TP + cdist/argsort matching) is
    # data-dependent host-side logic; only the with_match_loss=False path is implemented.

    loss = 0.0
    for k, v in list(loss_dict.items()):
        if not with_sol_loss and 'sol_' in k:
            continue
        if k in LOSS_W:
            v = v * LOSS_W[k]
            loss_dict[k] = v
            loss = loss + v
    loss_dict['loss'] = loss

    if with_sol_loss:
        loss_dict['center_loss'] = loss_dict['sol_center_loss'] + loss_dict['tp_center_loss']
        loss_dict['displacement_loss'] = (loss_dict['sol_displacement_loss']
                                          + loss_dict['tp_displacement_loss'])
        loss_dict['match_loss'] = loss_dict['tp_match_loss'] + loss_dict['sol_match_loss']
        loss_dict['match_ratio'] = loss_dict['tp_match_ratio']
    else:
        loss_dict['center_loss'] = loss_dict['tp_center_loss']
        loss_dict['displacement_loss'] = loss_dict['tp_displacement_loss']
        loss_dict['match_loss'] = loss_dict['tp_match_loss']
        loss_dict['match_ratio'] = loss_dict['tp_match_ratio']
    return loss_dict


# ---------------- pure-JAX reference (mirrors the PyTorch functions) -----------
def _ref_loss_dict(preds, gts, with_sol_loss=True):
    def wbce(x, y, pw, nw):
        pos = (y != 0).astype(jnp.float32)
        neg = 1.0 - pos
        l = jnp.maximum(x, 0.0) - x * y + jnp.log(1.0 + jnp.exp(-jnp.abs(x)))
        return pw * (l * pos).sum() / pos.sum() + nw * (l * neg).sum() / neg.sum()

    def sl1(a, b):
        d = a - b
        ad = jnp.abs(d)
        return jnp.where(ad < 1.0, 0.5 * d * d, ad - 0.5)

    def disp(pred, gt):
        pos_v = jnp.abs(gt).sum(axis=1)
        mask = (pos_v != 0).astype(jnp.float32)[:, None]
        pm, gm = pred * mask, gt * mask
        l1 = sl1(pm, gm).sum(axis=1)
        pm2 = jnp.concatenate([pm[:, 2:], pm[:, :2]], axis=1)
        l2 = sl1(pm2, gm).sum(axis=1)
        return jnp.minimum(l1, l2).sum() / mask.sum()

    def len_angle(p_len, p_ang, g_len, g_ang):
        p_len = jax.nn.sigmoid(p_len)
        p_ang = jax.nn.sigmoid(p_ang)
        m = (g_len != 0).astype(jnp.float32)
        return ((sl1(p_len, g_len) * m).sum() / m.sum(),
                (sl1(p_ang, g_ang) * m).sum() / m.sum())

    d = {
        'line_seg_loss': wbce(preds[:, 15], gts[:, 15], 1.0, 1.0),
        'junc_seg_loss': wbce(preds[:, 14], gts[:, 14], 1.0, 30.0),
    }
    if with_sol_loss:
        sl, sa = len_angle(preds[:, 5], preds[:, 6], gts[:, 5], gts[:, 6])
        d.update({'sol_center_loss': wbce(preds[:, 0], gts[:, 0], 1.0, 30.0),
                  'sol_displacement_loss': disp(preds[:, 1:5], gts[:, 1:5]),
                  'sol_len_loss': sl, 'sol_angle_loss': sa, 'sol_match_loss': 0.0})
    tl, ta = len_angle(preds[:, 12], preds[:, 13], gts[:, 12], gts[:, 13])
    d.update({'tp_center_loss': wbce(preds[:, 7], gts[:, 7], 1.0, 30.0),
              'tp_displacement_loss': disp(preds[:, 8:12], gts[:, 8:12]),
              'tp_len_loss': tl, 'tp_angle_loss': ta,
              'tp_match_loss': 0.0, 'tp_match_ratio': 0.0})
    loss = 0.0
    for k, v in list(d.items()):
        if not with_sol_loss and 'sol_' in k:
            continue
        if k in LOSS_W:
            v = v * LOSS_W[k]
            d[k] = v
            loss = loss + v
    d['loss'] = loss
    return d


_CHECK_KEYS = ['line_seg_loss', 'junc_seg_loss', 'sol_center_loss',
               'sol_displacement_loss', 'sol_len_loss', 'sol_angle_loss',
               'tp_center_loss', 'tp_displacement_loss', 'tp_len_loss',
               'tp_angle_loss', 'loss']


def _check(out, ref, rtol, atol, tag):
    for k in _CHECK_KEYS:
        if not jnp.allclose(jnp.asarray(out[k]), jnp.asarray(ref[k]), rtol=rtol, atol=atol):
            raise AssertionError(f"{tag} mismatch at {k}: {out[k]} vs {ref[k]}")


if __name__ == "__main__":
    key = jax.random.PRNGKey(0)

    def make_inputs(B, H, W, salt):
        k1, k2, k3 = jax.random.split(jax.random.fold_in(key, salt), 3)
        preds = jax.random.normal(k1, (B, 16, H, W), jnp.float32)
        # gts: sparse non-negative targets so every channel has both pos & neg pixels
        gt_vals = jax.random.uniform(k2, (B, 16, H, W), jnp.float32, minval=0.05, maxval=1.0)
        gt_mask = (jax.random.uniform(k3, (B, 16, H, W)) < 0.3).astype(jnp.float32)
        return preds, gt_vals * gt_mask

    # --- 1) default (generation-aware) chunking: single full-width chunk, P=1, f32
    preds, gts = make_inputs(2, 16, 16, salt=1)
    out = line_segment_loss(preds, gts, with_sol_loss=True)
    jax.block_until_ready(out['loss'])
    _check(out, _ref_loss_dict(preds, gts), 1e-3, 1e-4, "f32")

    # --- 2) multi-chunk accumulation + chunk-axis parallel split (B=1, 8 chunks, P=2)
    preds2, gts2 = make_inputs(1, 32, 32, salt=2)
    out2 = line_segment_loss(preds2, gts2, with_sol_loss=True, max_chunk=128)
    jax.block_until_ready(out2['loss'])
    _check(out2, _ref_loss_dict(preds2, gts2), 1e-3, 1e-4, "f32-multichunk")

    # --- 3) bf16 native-dtype path (kernel loads bf16 tiles, computes in f32)
    preds_bf = preds.astype(jnp.bfloat16)
    gts_bf = gts.astype(jnp.bfloat16)
    out_bf = line_segment_loss(preds_bf, gts_bf, with_sol_loss=True)
    jax.block_until_ready(out_bf['loss'])
    ref_bf = _ref_loss_dict(preds_bf.astype(jnp.float32),
                            gts_bf.astype(jnp.float32), with_sol_loss=True)
    _check(out_bf, ref_bf, 5e-3, 1e-3, "bf16")

    print("KERNEL_OK")
</pallas_src>

<mosaic_0001>
module attributes {stable_mosaic.version = 11 : i64} {
  func.func @_loss_sums_kernel(%arg0: i32, %arg1: i32, %arg2: i32, %arg3: memref<1x16x256xf32, #tpu.memory_space<vmem>>, %arg4: memref<1x16x256xf32, #tpu.memory_space<vmem>>, %arg5: memref<1x1x1x22xf32, #tpu.memory_space<vmem>>, %arg6: memref<8x1xf32, #tpu.memory_space<vmem>>, %arg7: memref<8x1xf32, #tpu.memory_space<vmem>>, %arg8: memref<8x1xf32, #tpu.memory_space<vmem>>, %arg9: memref<4x1xf32, #tpu.memory_space<vmem>>, %arg10: memref<8x1xf32, #tpu.memory_space<vmem>>, %arg11: memref<8x1xf32, #tpu.memory_space<vmem>>, %arg12: memref<8x1xf32, #tpu.memory_space<vmem>>, %arg13: memref<4x1xf32, #tpu.memory_space<vmem>>) attributes {dimension_semantics = [#tpu.dimension_semantics<parallel>, #tpu.dimension_semantics<parallel>, #tpu.dimension_semantics<arbitrary>], iteration_bounds = array<i64: 1, 2, 1>, scalar_prefetch = 0 : i64, scratch_operands = 8 : i64, tpu.core_type = #tpu.core_type<tc>, window_params = [{transform_indices = @transform_0, window_bounds = array<i64: 1, 16, 256>}, {transform_indices = @transform_1, window_bounds = array<i64: 1, 16, 256>}, {transform_indices = @transform_2, window_bounds = array<i64: 1, 1, 1, 22>}]} {
    %c0_i32 = arith.constant 0 : i32
    %0 = arith.cmpi eq, %arg2, %c0_i32 : i32
    %1 = arith.extui %0 : i1 to i32
    %c0_i32_0 = arith.constant 0 : i32
    %2 = arith.cmpi ne, %1, %c0_i32_0 : i32
    scf.if %2 {
      %cst_108 = arith.constant 0.000000e+00 : f32
      %272 = vector.broadcast %cst_108 : f32 to vector<8x1xf32>
      %c0_109 = arith.constant 0 : index
      %c0_110 = arith.constant 0 : index
      %273 = vector.load %arg6[%c0_109, %c0_110] : memref<8x1xf32, #tpu.memory_space<vmem>>, vector<8x1xf32>
      tpu.vector_store %arg6[%c0_109, %c0_110], %272 {strides = array<i32>} : memref<8x1xf32, #tpu.memory_space<vmem>>, vector<8x1xf32>,
      %cst_111 = arith.constant 0.000000e+00 : f32
      %274 = vector.broadcast %cst_111 : f32 to vector<8x1xf32>
      %c0_112 = arith.constant 0 : index
      %c0_113 = arith.constant 0 : index
      %275 = vector.load %arg7[%c0_112, %c0_113] : memref<8x1xf32, #tpu.memory_space<vmem>>, vector<8x1xf32>
      tpu.vector_store %arg7[%c0_112, %c0_113], %274 {strides = array<i32>} : memref<8x1xf32, #tpu.memory_space<vmem>>, vector<8x1xf32>,
      %cst_114 = arith.constant 0.000000e+00 : f32
      %276 = vector.broadcast %cst_114 : f32 to vector<8x1xf32>
      %c0_115 = arith.constant 0 : index
      %c0_116 = arith.constant 0 : index
      %277 = vector.load %arg8[%c0_115, %c0_116] : memref<8x1xf32, #tpu.memory_space<vmem>>, vector<8x1xf32>
      tpu.vector_store %arg8[%c0_115, %c0_116], %276 {strides = array<i32>} : memref<8x1xf32, #tpu.memory_space<vmem>>, vector<8x1xf32>,
      %cst_117 = arith.constant 0.000000e+00 : f32
      %278 = vector.broadcast %cst_117 : f32 to vector<4x1xf32>
      %c0_118 = arith.constant 0 : index
      %c0_119 = arith.constant 0 : index
      %279 = vector.load %arg9[%c0_118, %c0_119] : memref<4x1xf32, #tpu.memory_space<vmem>>, vector<4x1xf32>
      tpu.vector_store %arg9[%c0_118, %c0_119], %278 {strides = array<i32>} : memref<4x1xf32, #tpu.memory_space<vmem>>, vector<4x1xf32>,
      %cst_120 = arith.constant 0.000000e+00 : f32
      %280 = vector.broadcast %cst_120 : f32 to vector<8x1xf32>
      %c0_121 = arith.constant 0 : index
      %c0_122 = arith.constant 0 : index
      %281 = vector.load %arg10[%c0_121, %c0_122] : memref<8x1xf32, #tpu.memory_space<vmem>>, vector<8x1xf32>
      tpu.vector_store %arg10[%c0_121, %c0_122], %280 {strides = array<i32>} : memref<8x1xf32, #tpu.memory_space<vmem>>, vector<8x1xf32>,
      %cst_123 = arith.constant 0.000000e+00 : f32
      %282 = vector.broadcast %cst_123 : f32 to vector<8x1xf32>
      %c0_124 = arith.constant 0 : index
      %c0_125 = arith.constant 0 : index
      %283 = vector.load %arg11[%c0_124, %c0_125] : memref<8x1xf32, #tpu.memory_space<vmem>>, vector<8x1xf32>
      tpu.vector_store %arg11[%c0_124, %c0_125], %282 {strides = array<i32>} : memref<8x1xf32, #tpu.memory_space<vmem>>, vector<8x1xf32>,
      %cst_126 = arith.constant 0.000000e+00 : f32
      %284 = vector.broadcast %cst_126 : f32 to vector<8x1xf32>
      %c0_127 = arith.constant 0 : index
      %c0_128 = arith.constant 0 : index
      %285 = vector.load %arg12[%c0_127, %c0_128] : memref<8x1xf32, #tpu.memory_space<vmem>>, vector<8x1xf32>
      tpu.vector_store %arg12[%c0_127, %c0_128], %284 {strides = array<i32>} : memref<8x1xf32, #tpu.memory_space<vmem>>, vector<8x1xf32>,
      %cst_129 = arith.constant 0.000000e+00 : f32
      %286 = vector.broadcast %cst_129 : f32 to vector<4x1xf32>
      %c0_130 = arith.constant 0 : index
      %c0_131 = arith.constant 0 : index
      %287 = vector.load %arg13[%c0_130, %c0_131] : memref<4x1xf32, #tpu.memory_space<vmem>>, vector<4x1xf32>
      tpu.vector_store %arg13[%c0_130, %c0_131], %286 {strides = array<i32>} : memref<4x1xf32, #tpu.memory_space<vmem>>, vector<4x1xf32>,
    } else {
    }
    %c0 = arith.constant 0 : index
    %c0_1 = arith.constant 0 : index
    %c0_2 = arith.constant 0 : index
    %3 = vector.load %arg3[%c0, %c0_1, %c0_2] : memref<1x16x256xf32, #tpu.memory_space<vmem>>, vector<1x8x256xf32>
    %4 = vector.shape_cast %3 : vector<1x8x256xf32> to vector<8x256xf32>
    %c0_3 = arith.constant 0 : index
    %c0_4 = arith.constant 0 : index
    %c0_5 = arith.constant 0 : index
    %5 = vector.load %arg4[%c0_3, %c0_4, %c0_5] : memref<1x16x256xf32, #tpu.memory_space<vmem>>, vector<1x8x256xf32>
    %6 = vector.shape_cast %5 : vector<1x8x256xf32> to vector<8x256xf32>
    %cst = arith.constant 0.000000e+00 : f32
    %7 = vector.broadcast %cst : f32 to vector<8x256xf32>
    %8 = arith.cmpf one, %6, %7 : vector<8x256xf32>
    %9 = arith.extui %8 : vector<8x256xi1> to vector<8x256xi32>
    %10 = arith.sitofp %9 : vector<8x256xi32> to vector<8x256xf32>
    %cst_6 = arith.constant 0.000000e+00 : f32
    %11 = vector.broadcast %cst_6 : f32 to vector<8x256xf32>
    %12 = arith.maximumf %4, %11 : vector<8x256xf32>
    %13 = arith.mulf %4, %6 : vector<8x256xf32>
    %14 = arith.subf %12, %13 : vector<8x256xf32>
    %15 = math.absf %4 : vector<8x256xf32>
    %cst_7 = arith.constant 0.000000e+00 : f32
    %16 = vector.broadcast %cst_7 : f32 to vector<8x256xf32>
    %17 = arith.subf %16, %15 : vector<8x256xf32>
    %18 = math.exp %17 : vector<8x256xf32>
    %cst_8 = arith.constant 1.000000e+00 : f32
    %19 = vector.broadcast %cst_8 : f32 to vector<8x256xf32>
    %20 = arith.addf %19, %18 : vector<8x256xf32>
    %21 = math.log %20 : vector<8x256xf32>
    %22 = arith.addf %14, %21 : vector<8x256xf32>
    %23 = arith.mulf %22, %10 : vector<8x256xf32>
    %cst_9 = arith.constant dense<0.000000e+00> : vector<8xf32>
    %24 = vector.multi_reduction <add>, %23, %cst_9 [1] : vector<8x256xf32> to vector<8xf32>
    %25 = vector.shape_cast %24 : vector<8xf32> to vector<8x1xf32>
    %cst_10 = arith.constant dense<0.000000e+00> : vector<8xf32>
    %26 = vector.multi_reduction <add>, %10, %cst_10 [1] : vector<8x256xf32> to vector<8xf32>
    %27 = vector.shape_cast %26 : vector<8xf32> to vector<8x1xf32>
    %cst_11 = arith.constant dense<0.000000e+00> : vector<8xf32>
    %28 = vector.multi_reduction <add>, %22, %cst_11 [1] : vector<8x256xf32> to vector<8xf32>
    %29 = vector.shape_cast %28 : vector<8xf32> to vector<8x1xf32>
    %30 = vector.extract_strided_slice %4 {offsets = [1, 0], sizes = [2, 256], strides = [1, 1]} : vector<8x256xf32> to vector<2x256xf32>
    %31 = vector.extract_strided_slice %4 {offsets = [3, 0], sizes = [2, 256], strides = [1, 1]} : vector<8x256xf32> to vector<2x256xf32>
    %32 = vector.extract_strided_slice %6 {offsets = [1, 0], sizes = [2, 256], strides = [1, 1]} : vector<8x256xf32> to vector<2x256xf32>
    %33 = vector.extract_strided_slice %6 {offsets = [3, 0], sizes = [2, 256], strides = [1, 1]} : vector<8x256xf32> to vector<2x256xf32>
    %34 = math.absf %32 : vector<2x256xf32>
    %cst_12 = arith.constant dense<0.000000e+00> : vector<256xf32>
    %35 = vector.multi_reduction <add>, %34, %cst_12 [0] : vector<2x256xf32> to vector<256xf32>
    %36 = vector.shape_cast %35 : vector<256xf32> to vector<1x256xf32>
    %37 = math.absf %33 : vector<2x256xf32>
    %cst_13 = arith.constant dense<0.000000e+00> : vector<256xf32>
    %38 = vector.multi_reduction <add>, %37, %cst_13 [0] : vector<2x256xf32> to vector<256xf32>
    %39 = vector.shape_cast %38 : vector<256xf32> to vector<1x256xf32>
    %40 = arith.addf %36, %39 : vector<1x256xf32>
    %cst_14 = arith.constant 0.000000e+00 : f32
    %41 = vector.broadcast %cst_14 : f32 to vector<1x256xf32>
    %42 = arith.cmpf one, %40, %41 : vector<1x256xf32>
    %43 = arith.extui %42 : vector<1x256xi1> to vector<1x256xi32>
    %44 = arith.sitofp %43 : vector<1x256xi32> to vector<1x256xf32>
    %45 = arith.subf %30, %32 : vector<2x256xf32>
    %46 = math.absf %45 : vector<2x256xf32>
    %cst_15 = arith.constant 1.000000e+00 : f32
    %47 = vector.broadcast %cst_15 : f32 to vector<2x256xf32>
    %48 = arith.cmpf olt, %46, %47 : vector<2x256xf32>
    %cst_16 = arith.constant 5.000000e-01 : f32
    %49 = vector.broadcast %cst_16 : f32 to vector<2x256xf32>
    %50 = arith.mulf %49, %45 : vector<2x256xf32>
    %51 = arith.mulf %50, %45 : vector<2x256xf32>
    %cst_17 = arith.constant 5.000000e-01 : f32
    %52 = vector.broadcast %cst_17 : f32 to vector<2x256xf32>
    %53 = arith.subf %46, %52 : vector<2x256xf32>
    %54 = arith.select %48, %51, %53 : vector<2x256xi1>, vector<2x256xf32>
    %55 = arith.subf %31, %33 : vector<2x256xf32>
    %56 = math.absf %55 : vector<2x256xf32>
    %cst_18 = arith.constant 1.000000e+00 : f32
    %57 = vector.broadcast %cst_18 : f32 to vector<2x256xf32>
    %58 = arith.cmpf olt, %56, %57 : vector<2x256xf32>
    %cst_19 = arith.constant 5.000000e-01 : f32
    %59 = vector.broadcast %cst_19 : f32 to vector<2x256xf32>
    %60 = arith.mulf %59, %55 : vector<2x256xf32>
    %61 = arith.mulf %60, %55 : vector<2x256xf32>
    %cst_20 = arith.constant 5.000000e-01 : f32
    %62 = vector.broadcast %cst_20 : f32 to vector<2x256xf32>
    %63 = arith.subf %56, %62 : vector<2x256xf32>
    %64 = arith.select %58, %61, %63 : vector<2x256xi1>, vector<2x256xf32>
    %65 = arith.addf %54, %64 : vector<2x256xf32>
    %cst_21 = arith.constant dense<0.000000e+00> : vector<256xf32>
    %66 = vector.multi_reduction <add>, %65, %cst_21 [0] : vector<2x256xf32> to vector<256xf32>
    %67 = vector.shape_cast %66 : vector<256xf32> to vector<1x256xf32>
    %68 = arith.subf %31, %32 : vector<2x256xf32>
    %69 = math.absf %68 : vector<2x256xf32>
    %cst_22 = arith.constant 1.000000e+00 : f32
    %70 = vector.broadcast %cst_22 : f32 to vector<2x256xf32>
    %71 = arith.cmpf olt, %69, %70 : vector<2x256xf32>
    %cst_23 = arith.constant 5.000000e-01 : f32
    %72 = vector.broadcast %cst_23 : f32 to vector<2x256xf32>
    %73 = arith.mulf %72, %68 : vector<2x256xf32>
    %74 = arith.mulf %73, %68 : vector<2x256xf32>
    %cst_24 = arith.constant 5.000000e-01 : f32
    %75 = vector.broadcast %cst_24 : f32 to vector<2x256xf32>
    %76 = arith.subf %69, %75 : vector<2x256xf32>
    %77 = arith.select %71, %74, %76 : vector<2x256xi1>, vector<2x256xf32>
    %78 = arith.subf %30, %33 : vector<2x256xf32>
    %79 = math.absf %78 : vector<2x256xf32>
    %cst_25 = arith.constant 1.000000e+00 : f32
    %80 = vector.broadcast %cst_25 : f32 to vector<2x256xf32>
    %81 = arith.cmpf olt, %79, %80 : vector<2x256xf32>
    %cst_26 = arith.constant 5.000000e-01 : f32
    %82 = vector.broadcast %cst_26 : f32 to vector<2x256xf32>
    %83 = arith.mulf %82, %78 : vector<2x256xf32>
    %84 = arith.mulf %83, %78 : vector<2x256xf32>
    %cst_27 = arith.constant 5.000000e-01 : f32
    %85 = vector.broadcast %cst_27 : f32 to vector<2x256xf32>
    %86 = arith.subf %79, %85 : vector<2x256xf32>
    %87 = arith.select %81, %84, %86 : vector<2x256xi1>, vector<2x256xf32>
    %88 = arith.addf %77, %87 : vector<2x256xf32>
    %cst_28 = arith.constant dense<0.000000e+00> : vector<256xf32>
    %89 = vector.multi_reduction <add>, %88, %cst_28 [0] : vector<2x256xf32> to vector<256xf32>
    %90 = vector.shape_cast %89 : vector<256xf32> to vector<1x256xf32>
    %91 = arith.minimumf %67, %90 : vector<1x256xf32>
    %92 = arith.mulf %91, %44 : vector<1x256xf32>
    %cst_29 = arith.constant dense<0.000000e+00> : vector<1xf32>
    %93 = vector.multi_reduction <add>, %92, %cst_29 [1] : vector<1x256xf32> to vector<1xf32>
    %94 = vector.shape_cast %93 : vector<1xf32> to vector<1x1xf32>
    %cst_30 = arith.constant dense<0.000000e+00> : vector<1xf32>
    %95 = vector.multi_reduction <add>, %44, %cst_30 [1] : vector<1x256xf32> to vector<1xf32>
    %96 = vector.shape_cast %95 : vector<1xf32> to vector<1x1xf32>
    %97 = vector.extract_strided_slice %4 {offsets = [5, 0], sizes = [2, 256], strides = [1, 1]} : vector<8x256xf32> to vector<2x256xf32>
    %98 = arith.negf %97 : vector<2x256xf32>
    %99 = math.exp %98 : vector<2x256xf32>
    %cst_31 = arith.constant 1.000000e+00 : f32
    %100 = vector.broadcast %cst_31 : f32 to vector<2x256xf32>
    %101 = arith.addf %100, %99 : vector<2x256xf32>
    %102 = arith.divf %100, %101 : vector<2x256xf32>
    %103 = vector.extract_strided_slice %6 {offsets = [5, 0], sizes = [2, 256], strides = [1, 1]} : vector<8x256xf32> to vector<2x256xf32>
    %104 = arith.subf %102, %103 : vector<2x256xf32>
    %105 = math.absf %104 : vector<2x256xf32>
    %cst_32 = arith.constant 1.000000e+00 : f32
    %106 = vector.broadcast %cst_32 : f32 to vector<2x256xf32>
    %107 = arith.cmpf olt, %105, %106 : vector<2x256xf32>
    %cst_33 = arith.constant 5.000000e-01 : f32
    %108 = vector.broadcast %cst_33 : f32 to vector<2x256xf32>
    %109 = arith.mulf %108, %104 : vector<2x256xf32>
    %110 = arith.mulf %109, %104 : vector<2x256xf32>
    %cst_34 = arith.constant 5.000000e-01 : f32
    %111 = vector.broadcast %cst_34 : f32 to vector<2x256xf32>
    %112 = arith.subf %105, %111 : vector<2x256xf32>
    %113 = arith.select %107, %110, %112 : vector<2x256xi1>, vector<2x256xf32>
    %114 = vector.extract_strided_slice %6 {offsets = [5, 0], sizes = [1, 256], strides = [1, 1]} : vector<8x256xf32> to vector<1x256xf32>
    %cst_35 = arith.constant 0.000000e+00 : f32
    %115 = vector.broadcast %cst_35 : f32 to vector<1x256xf32>
    %116 = arith.cmpf one, %114, %115 : vector<1x256xf32>
    %117 = arith.extui %116 : vector<1x256xi1> to vector<1x256xi32>
    %118 = arith.sitofp %117 : vector<1x256xi32> to vector<1x256xf32>
    %119 = vector.broadcast %118 : vector<1x256xf32> to vector<2x256xf32>
    %120 = arith.mulf %113, %119 : vector<2x256xf32>
    %cst_36 = arith.constant dense<0.000000e+00> : vector<2xf32>
    %121 = vector.multi_reduction <add>, %120, %cst_36 [1] : vector<2x256xf32> to vector<2xf32>
    %122 = vector.shape_cast %121 : vector<2xf32> to vector<2x1xf32>
    %123 = tpu.concatenate %94, %96, %122 in 0 : vector<1x1xf32>, vector<1x1xf32>, vector<2x1xf32> -> vector<4x1xf32>
    %c0_37 = arith.constant 0 : index
    %c8 = arith.constant 8 : index
    %c0_38 = arith.constant 0 : index
    %124 = vector.load %arg3[%c0_37, %c8, %c0_38] : memref<1x16x256xf32, #tpu.memory_space<vmem>>, vector<1x8x256xf32>
    %125 = vector.shape_cast %124 : vector<1x8x256xf32> to vector<8x256xf32>
    %c0_39 = arith.constant 0 : index
    %c8_40 = arith.constant 8 : index
    %c0_41 = arith.constant 0 : index
    %126 = vector.load %arg4[%c0_39, %c8_40, %c0_41] : memref<1x16x256xf32, #tpu.memory_space<vmem>>, vector<1x8x256xf32>
    %127 = vector.shape_cast %126 : vector<1x8x256xf32> to vector<8x256xf32>
    %cst_42 = arith.constant 0.000000e+00 : f32
    %128 = vector.broadcast %cst_42 : f32 to vector<8x256xf32>
    %129 = arith.cmpf one, %127, %128 : vector<8x256xf32>
    %130 = arith.extui %129 : vector<8x256xi1> to vector<8x256xi32>
    %131 = arith.sitofp %130 : vector<8x256xi32> to vector<8x256xf32>
    %cst_43 = arith.constant 0.000000e+00 : f32
    %132 = vector.broadcast %cst_43 : f32 to vector<8x256xf32>
    %133 = arith.maximumf %125, %132 : vector<8x256xf32>
    %134 = arith.mulf %125, %127 : vector<8x256xf32>
    %135 = arith.subf %133, %134 : vector<8x256xf32>
    %136 = math.absf %125 : vector<8x256xf32>
    %cst_44 = arith.constant 0.000000e+00 : f32
    %137 = vector.broadcast %cst_44 : f32 to vector<8x256xf32>
    %138 = arith.subf %137, %136 : vector<8x256xf32>
    %139 = math.exp %138 : vector<8x256xf32>
    %cst_45 = arith.constant 1.000000e+00 : f32
    %140 = vector.broadcast %cst_45 : f32 to vector<8x256xf32>
    %141 = arith.addf %140, %139 : vector<8x256xf32>
    %142 = math.log %141 : vector<8x256xf32>
    %143 = arith.addf %135, %142 : vector<8x256xf32>
    %144 = arith.mulf %143, %131 : vector<8x256xf32>
    %cst_46 = arith.constant dense<0.000000e+00> : vector<8xf32>
    %145 = vector.multi_reduction <add>, %144, %cst_46 [1] : vector<8x256xf32> to vector<8xf32>
    %146 = vector.shape_cast %145 : vector<8xf32> to vector<8x1xf32>
    %cst_47 = arith.constant dense<0.000000e+00> : vector<8xf32>
    %147 = vector.multi_reduction <add>, %131, %cst_47 [1] : vector<8x256xf32> to vector<8xf32>
    %148 = vector.shape_cast %147 : vector<8xf32> to vector<8x1xf32>
    %cst_48 = arith.constant dense<0.000000e+00> : vector<8xf32>
    %149 = vector.multi_reduction <add>, %143, %cst_48 [1] : vector<8x256xf32> to vector<8xf32>
    %150 = vector.shape_cast %149 : vector<8xf32> to vector<8x1xf32>
    %151 = vector.extract_strided_slice %125 {offsets = [0, 0], sizes = [2, 256], strides = [1, 1]} : vector<8x256xf32> to vector<2x256xf32>
    %152 = vector.extract_strided_slice %125 {offsets = [2, 0], sizes = [2, 256], strides = [1, 1]} : vector<8x256xf32> to vector<2x256xf32>
    %153 = vector.extract_strided_slice %127 {offsets = [0, 0], sizes = [2, 256], strides = [1, 1]} : vector<8x256xf32> to vector<2x256xf32>
    %154 = vector.extract_strided_slice %127 {offsets = [2, 0], sizes = [2, 256], strides = [1, 1]} : vector<8x256xf32> to vector<2x256xf32>
    %155 = math.absf %153 : vector<2x256xf32>
    %cst_49 = arith.constant dense<0.000000e+00> : vector<256xf32>
    %156 = vector.multi_reduction <add>, %155, %cst_49 [0] : vector<2x256xf32> to vector<256xf32>
    %157 = vector.shape_cast %156 : vector<256xf32> to vector<1x256xf32>
    %158 = math.absf %154 : vector<2x256xf32>
    %cst_50 = arith.constant dense<0.000000e+00> : vector<256xf32>
    %159 = vector.multi_reduction <add>, %158, %cst_50 [0] : vector<2x256xf32> to vector<256xf32>
    %160 = vector.shape_cast %159 : vector<256xf32> to vector<1x256xf32>
    %161 = arith.addf %157, %160 : vector<1x256xf32>
    %cst_51 = arith.constant 0.000000e+00 : f32
    %162 = vector.broadcast %cst_51 : f32 to vector<1x256xf32>
    %163 = arith.cmpf one, %161, %162 : vector<1x256xf32>
    %164 = arith.extui %163 : vector<1x256xi1> to vector<1x256xi32>
    %165 = arith.sitofp %164 : vector<1x256xi32> to vector<1x256xf32>
    %166 = arith.subf %151, %153 : vector<2x256xf32>
    %167 = math.absf %166 : vector<2x256xf32>
    %cst_52 = arith.constant 1.000000e+00 : f32
    %168 = vector.broadcast %cst_52 : f32 to vector<2x256xf32>
    %169 = arith.cmpf olt, %167, %168 : vector<2x256xf32>
    %cst_53 = arith.constant 5.000000e-01 : f32
    %170 = vector.broadcast %cst_53 : f32 to vector<2x256xf32>
    %171 = arith.mulf %170, %166 : vector<2x256xf32>
    %172 = arith.mulf %171, %166 : vector<2x256xf32>
    %cst_54 = arith.constant 5.000000e-01 : f32
    %173 = vector.broadcast %cst_54 : f32 to vector<2x256xf32>
    %174 = arith.subf %167, %173 : vector<2x256xf32>
    %175 = arith.select %169, %172, %174 : vector<2x256xi1>, vector<2x256xf32>
    %176 = arith.subf %152, %154 : vector<2x256xf32>
    %177 = math.absf %176 : vector<2x256xf32>
    %cst_55 = arith.constant 1.000000e+00 : f32
    %178 = vector.broadcast %cst_55 : f32 to vector<2x256xf32>
    %179 = arith.cmpf olt, %177, %178 : vector<2x256xf32>
    %cst_56 = arith.constant 5.000000e-01 : f32
    %180 = vector.broadcast %cst_56 : f32 to vector<2x256xf32>
    %181 = arith.mulf %180, %176 : vector<2x256xf32>
    %182 = arith.mulf %181, %176 : vector<2x256xf32>
    %cst_57 = arith.constant 5.000000e-01 : f32
    %183 = vector.broadcast %cst_57 : f32 to vector<2x256xf32>
    %184 = arith.subf %177, %183 : vector<2x256xf32>
    %185 = arith.select %179, %182, %184 : vector<2x256xi1>, vector<2x256xf32>
    %186 = arith.addf %175, %185 : vector<2x256xf32>
    %cst_58 = arith.constant dense<0.000000e+00> : vector<256xf32>
    %187 = vector.multi_reduction <add>, %186, %cst_58 [0] : vector<2x256xf32> to vector<256xf32>
    %188 = vector.shape_cast %187 : vector<256xf32> to vector<1x256xf32>
    %189 = arith.subf %152, %153 : vector<2x256xf32>
    %190 = math.absf %189 : vector<2x256xf32>
    %cst_59 = arith.constant 1.000000e+00 : f32
    %191 = vector.broadcast %cst_59 : f32 to vector<2x256xf32>
    %192 = arith.cmpf olt, %190, %191 : vector<2x256xf32>
    %cst_60 = arith.constant 5.000000e-01 : f32
    %193 = vector.broadcast %cst_60 : f32 to vector<2x256xf32>
    %194 = arith.mulf %193, %189 : vector<2x256xf32>
    %195 = arith.mulf %194, %189 : vector<2x256xf32>
    %cst_61 = arith.constant 5.000000e-01 : f32
    %196 = vector.broadcast %cst_61 : f32 to vector<2x256xf32>
    %197 = arith.subf %190, %196 : vector<2x256xf32>
    %198 = arith.select %192, %195, %197 : vector<2x256xi1>, vector<2x256xf32>
    %199 = arith.subf %151, %154 : vector<2x256xf32>
    %200 = math.absf %199 : vector<2x256xf32>
    %cst_62 = arith.constant 1.000000e+00 : f32
    %201 = vector.broadcast %cst_62 : f32 to vector<2x256xf32>
    %202 = arith.cmpf olt, %200, %201 : vector<2x256xf32>
    %cst_63 = arith.constant 5.000000e-01 : f32
    %203 = vector.broadcast %cst_63 : f32 to vector<2x256xf32>
    %204 = arith.mulf %203, %199 : vector<2x256xf32>
    %205 = arith.mulf %204, %199 : vector<2x256xf32>
    %cst_64 = arith.constant 5.000000e-01 : f32
    %206 = vector.broadcast %cst_64 : f32 to vector<2x256xf32>
    %207 = arith.subf %200, %206 : vector<2x256xf32>
    %208 = arith.select %202, %205, %207 : vector<2x256xi1>, vector<2x256xf32>
    %209 = arith.addf %198, %208 : vector<2x256xf32>
    %cst_65 = arith.constant dense<0.000000e+00> : vector<256xf32>
    %210 = vector.multi_reduction <add>, %209, %cst_65 [0] : vector<2x256xf32> to vector<256xf32>
    %211 = vector.shape_cast %210 : vector<256xf32> to vector<1x256xf32>
    %212 = arith.minimumf %188, %211 : vector<1x256xf32>
    %213 = arith.mulf %212, %165 : vector<1x256xf32>
    %cst_66 = arith.constant dense<0.000000e+00> : vector<1xf32>
    %214 = vector.multi_reduction <add>, %213, %cst_66 [1] : vector<1x256xf32> to vector<1xf32>
    %215 = vector.shape_cast %214 : vector<1xf32> to vector<1x1xf32>
    %cst_67 = arith.constant dense<0.000000e+00> : vector<1xf32>
    %216 = vector.multi_reduction <add>, %165, %cst_67 [1] : vector<1x256xf32> to vector<1xf32>
    %217 = vector.shape_cast %216 : vector<1xf32> to vector<1x1xf32>
    %218 = vector.extract_strided_slice %125 {offsets = [4, 0], sizes = [2, 256], strides = [1, 1]} : vector<8x256xf32> to vector<2x256xf32>
    %219 = arith.negf %218 : vector<2x256xf32>
    %220 = math.exp %219 : vector<2x256xf32>
    %cst_68 = arith.constant 1.000000e+00 : f32
    %221 = vector.broadcast %cst_68 : f32 to vector<2x256xf32>
    %222 = arith.addf %221, %220 : vector<2x256xf32>
    %223 = arith.divf %221, %222 : vector<2x256xf32>
    %224 = vector.extract_strided_slice %127 {offsets = [4, 0], sizes = [2, 256], strides = [1, 1]} : vector<8x256xf32> to vector<2x256xf32>
    %225 = arith.subf %223, %224 : vector<2x256xf32>
    %226 = math.absf %225 : vector<2x256xf32>
    %cst_69 = arith.constant 1.000000e+00 : f32
    %227 = vector.broadcast %cst_69 : f32 to vector<2x256xf32>
    %228 = arith.cmpf olt, %226, %227 : vector<2x256xf32>
    %cst_70 = arith.constant 5.000000e-01 : f32
    %229 = vector.broadcast %cst_70 : f32 to vector<2x256xf32>
    %230 = arith.mulf %229, %225 : vector<2x256xf32>
    %231 = arith.mulf %230, %225 : vector<2x256xf32>
    %cst_71 = arith.constant 5.000000e-01 : f32
    %232 = vector.broadcast %cst_71 : f32 to vector<2x256xf32>
    %233 = arith.subf %226, %232 : vector<2x256xf32>
    %234 = arith.select %228, %231, %233 : vector<2x256xi1>, vector<2x256xf32>
    %235 = vector.extract_strided_slice %127 {offsets = [4, 0], sizes = [1, 256], strides = [1, 1]} : vector<8x256xf32> to vector<1x256xf32>
    %cst_72 = arith.constant 0.000000e+00 : f32
    %236 = vector.broadcast %cst_72 : f32 to vector<1x256xf32>
    %237 = arith.cmpf one, %235, %236 : vector<1x256xf32>
    %238 = arith.extui %237 : vector<1x256xi1> to vector<1x256xi32>
    %239 = arith.sitofp %238 : vector<1x256xi32> to vector<1x256xf32>
    %240 = vector.broadcast %239 : vector<1x256xf32> to vector<2x256xf32>
    %241 = arith.mulf %234, %240 : vector<2x256xf32>
    %cst_73 = arith.constant dense<0.000000e+00> : vector<2xf32>
    %242 = vector.multi_reduction <add>, %241, %cst_73 [1] : vector<2x256xf32> to vector<2xf32>
    %243 = vector.shape_cast %242 : vector<2xf32> to vector<2x1xf32>
    %244 = tpu.concatenate %215, %217, %243 in 0 : vector<1x1xf32>, vector<1x1xf32>, vector<2x1xf32> -> vector<4x1xf32>
    %c0_74 = arith.constant 0 : index
    %c0_75 = arith.constant 0 : index
    %245 = vector.load %arg6[%c0_74, %c0_75] : memref<8x1xf32, #tpu.memory_space<vmem>>, vector<8x1xf32>
    %246 = arith.addf %245, %25 : vector<8x1xf32>
    %c0_76 = arith.constant 0 : index
    %c0_77 = arith.constant 0 : index
    %247 = vector.load %arg6[%c0_76, %c0_77] : memref<8x1xf32, #tpu.memory_space<vmem>>, vector<8x1xf32>
    tpu.vector_store %arg6[%c0_76, %c0_77], %246 {strides = array<i32>} : memref<8x1xf32, #tpu.memory_space<vmem>>, vector<8x1xf32>,
    %c0_78 = arith.constant 0 : index
    %c0_79 = arith.constant 0 : index
    %248 = vector.load %arg7[%c0_78, %c0_79] : memref<8x1xf32, #tpu.memory_space<vmem>>, vector<8x1xf32>
    %249 = arith.addf %248, %27 : vector<8x1xf32>
    %c0_80 = arith.constant 0 : index
    %c0_81 = arith.constant 0 : index
    %250 = vector.load %arg7[%c0_80, %c0_81] : memref<8x1xf32, #tpu.memory_space<vmem>>, vector<8x1xf32>
    tpu.vector_store %arg7[%c0_80, %c0_81], %249 {strides = array<i32>} : memref<8x1xf32, #tpu.memory_space<vmem>>, vector<8x1xf32>,
    %c0_82 = arith.constant 0 : index
    %c0_83 = arith.constant 0 : index
    %251 = vector.load %arg8[%c0_82, %c0_83] : memref<8x1xf32, #tpu.memory_space<vmem>>, vector<8x1xf32>
    %252 = arith.addf %251, %29 : vector<8x1xf32>
    %c0_84 = arith.constant 0 : index
    %c0_85 = arith.constant 0 : index
    %253 = vector.load %arg8[%c0_84, %c0_85] : memref<8x1xf32, #tpu.memory_space<vmem>>, vector<8x1xf32>
    tpu.vector_store %arg8[%c0_84, %c0_85], %252 {strides = array<i32>} : memref<8x1xf32, #tpu.memory_space<vmem>>, vector<8x1xf32>,
    %c0_86 = arith.constant 0 : index
    %c0_87 = arith.constant 0 : index
    %254 = vector.load %arg9[%c0_86, %c0_87] : memref<4x1xf32, #tpu.memory_space<vmem>>, vector<4x1xf32>
    %255 = arith.addf %254, %123 : vector<4x1xf32>
    %c0_88 = arith.constant 0 : index
    %c0_89 = arith.constant 0 : index
    %256 = vector.load %arg9[%c0_88, %c0_89] : memref<4x1xf32, #tpu.memory_space<vmem>>, vector<4x1xf32>
    tpu.vector_store %arg9[%c0_88, %c0_89], %255 {strides = array<i32>} : memref<4x1xf32, #tpu.memory_space<vmem>>, vector<4x1xf32>,
    %c0_90 = arith.constant 0 : index
    %c0_91 = arith.constant 0 : index
    %257 = vector.load %arg10[%c0_90, %c0_91] : memref<8x1xf32, #tpu.memory_space<vmem>>, vector<8x1xf32>
    %258 = arith.addf %257, %146 : vector<8x1xf32>
    %c0_92 = arith.constant 0 : index
    %c0_93 = arith.constant 0 : index
    %259 = vector.load %arg10[%c0_92, %c0_93] : memref<8x1xf32, #tpu.memory_space<vmem>>, vector<8x1xf32>
    tpu.vector_store %arg10[%c0_92, %c0_93], %258 {strides = array<i32>} : memref<8x1xf32, #tpu.memory_space<vmem>>, vector<8x1xf32>,
    %c0_94 = arith.constant 0 : index
    %c0_95 = arith.constant 0 : index
    %260 = vector.load %arg11[%c0_94, %c0_95] : memref<8x1xf32, #tpu.memory_space<vmem>>, vector<8x1xf32>
    %261 = arith.addf %260, %148 : vector<8x1xf32>
    %c0_96 = arith.constant 0 : index
    %c0_97 = arith.constant 0 : index
    %262 = vector.load %arg11[%c0_96, %c0_97] : memref<8x1xf32, #tpu.memory_space<vmem>>, vector<8x1xf32>
    tpu.vector_store %arg11[%c0_96, %c0_97], %261 {strides = array<i32>} : memref<8x1xf32, #tpu.memory_space<vmem>>, vector<8x1xf32>,
    %c0_98 = arith.constant 0 : index
    %c0_99 = arith.constant 0 : index
    %263 = vector.load %arg12[%c0_98, %c0_99] : memref<8x1xf32, #tpu.memory_space<vmem>>, vector<8x1xf32>
    %264 = arith.addf %263, %150 : vector<8x1xf32>
    %c0_100 = arith.constant 0 : index
    %c0_101 = arith.constant 0 : index
    %265 = vector.load %arg12[%c0_100, %c0_101] : memref<8x1xf32, #tpu.memory_space<vmem>>, vector<8x1xf32>
    tpu.vector_store %arg12[%c0_100, %c0_101], %264 {strides = array<i32>} : memref<8x1xf32, #tpu.memory_space<vmem>>, vector<8x1xf32>,
    %c0_102 = arith.constant 0 : index
    %c0_103 = arith.constant 0 : index
    %266 = vector.load %arg13[%c0_102, %c0_103] : memref<4x1xf32, #tpu.memory_space<vmem>>, vector<4x1xf32>
    %267 = arith.addf %266, %244 : vector<4x1xf32>
    %c0_104 = arith.constant 0 : index
    %c0_105 = arith.constant 0 : index
    %268 = vector.load %arg13[%c0_104, %c0_105] : memref<4x1xf32, #tpu.memory_space<vmem>>, vector<4x1xf32>
    tpu.vector_store %arg13[%c0_104, %c0_105], %267 {strides = array<i32>} : memref<4x1xf32, #tpu.memory_space<vmem>>, vector<4x1xf32>,
    %c0_i32_106 = arith.constant 0 : i32
    %269 = arith.cmpi eq, %arg2, %c0_i32_106 : i32
    %270 = arith.extui %269 : i1 to i32
    %c0_i32_107 = arith.constant 0 : i32
    %271 = arith.cmpi ne, %270, %c0_i32_107 : i32
    scf.if %271 {
      %c0_108 = arith.constant 0 : index
      %c0_109 = arith.constant 0 : index
      %272 = vector.load %arg6[%c0_108, %c0_109] : memref<8x1xf32, #tpu.memory_space<vmem>>, vector<1x1xf32>
      %c0_110 = arith.constant 0 : index
      %c0_111 = arith.constant 0 : index
      %273 = vector.load %arg7[%c0_110, %c0_111] : memref<8x1xf32, #tpu.memory_space<vmem>>, vector<1x1xf32>
      %c0_112 = arith.constant 0 : index
      %c0_113 = arith.constant 0 : index
      %274 = vector.load %arg8[%c0_112, %c0_113] : memref<8x1xf32, #tpu.memory_space<vmem>>, vector<1x1xf32>
      %c7 = arith.constant 7 : index
      %c0_114 = arith.constant 0 : index
      %275 = vector.load %arg6[%c7, %c0_114] : memref<8x1xf32, #tpu.memory_space<vmem>>, vector<1x1xf32>
      %c7_115 = arith.constant 7 : index
      %c0_116 = arith.constant 0 : index
      %276 = vector.load %arg7[%c7_115, %c0_116] : memref<8x1xf32, #tpu.memory_space<vmem>>, vector<1x1xf32>
      %c7_117 = arith.constant 7 : index
      %c0_118 = arith.constant 0 : index
      %277 = vector.load %arg8[%c7_117, %c0_118] : memref<8x1xf32, #tpu.memory_space<vmem>>, vector<1x1xf32>
      %c0_119 = arith.constant 0 : index
      %c0_120 = arith.constant 0 : index
      %278 = vector.load %arg9[%c0_119, %c0_120] : memref<4x1xf32, #tpu.memory_space<vmem>>, vector<1x1xf32>
      %c1 = arith.constant 1 : index
      %c0_121 = arith.constant 0 : index
      %279 = vector.load %arg9[%c1, %c0_121] : memref<4x1xf32, #tpu.memory_space<vmem>>, vector<1x1xf32>
      %c2 = arith.constant 2 : index
      %c0_122 = arith.constant 0 : index
      %280 = vector.load %arg9[%c2, %c0_122] : memref<4x1xf32, #tpu.memory_space<vmem>>, vector<1x1xf32>
      %c3 = arith.constant 3 : index
      %c0_123 = arith.constant 0 : index
      %281 = vector.load %arg9[%c3, %c0_123] : memref<4x1xf32, #tpu.memory_space<vmem>>, vector<1x1xf32>
      %c5 = arith.constant 5 : index
      %c0_124 = arith.constant 0 : index
      %282 = vector.load %arg7[%c5, %c0_124] : memref<8x1xf32, #tpu.memory_space<vmem>>, vector<1x1xf32>
      %c6 = arith.constant 6 : index
      %c0_125 = arith.constant 0 : index
      %283 = vector.load %arg10[%c6, %c0_125] : memref<8x1xf32, #tpu.memory_space<vmem>>, vector<1x1xf32>
      %c6_126 = arith.constant 6 : index
      %c0_127 = arith.constant 0 : index
      %284 = vector.load %arg11[%c6_126, %c0_127] : memref<8x1xf32, #tpu.memory_space<vmem>>, vector<1x1xf32>
      %c6_128 = arith.constant 6 : index
      %c0_129 = arith.constant 0 : index
      %285 = vector.load %arg12[%c6_128, %c0_129] : memref<8x1xf32, #tpu.memory_space<vmem>>, vector<1x1xf32>
      %c7_130 = arith.constant 7 : index
      %c0_131 = arith.constant 0 : index
      %286 = vector.load %arg10[%c7_130, %c0_131] : memref<8x1xf32, #tpu.memory_space<vmem>>, vector<1x1xf32>
      %c7_132 = arith.constant 7 : index
      %c0_133 = arith.constant 0 : index
      %287 = vector.load %arg11[%c7_132, %c0_133] : memref<8x1xf32, #tpu.memory_space<vmem>>, vector<1x1xf32>
      %c7_134 = arith.constant 7 : index
      %c0_135 = arith.constant 0 : index
      %288 = vector.load %arg12[%c7_134, %c0_135] : memref<8x1xf32, #tpu.memory_space<vmem>>, vector<1x1xf32>
      %c0_136 = arith.constant 0 : index
      %c0_137 = arith.constant 0 : index
      %289 = vector.load %arg13[%c0_136, %c0_137] : memref<4x1xf32, #tpu.memory_space<vmem>>, vector<1x1xf32>
      %c1_138 = arith.constant 1 : index
      %c0_139 = arith.constant 0 : index
      %290 = vector.load %arg13[%c1_138, %c0_139] : memref<4x1xf32, #tpu.memory_space<vmem>>, vector<1x1xf32>
      %c2_140 = arith.constant 2 : index
      %c0_141 = arith.constant 0 : index
      %291 = vector.load %arg13[%c2_140, %c0_141] : memref<4x1xf32, #tpu.memory_space<vmem>>, vector<1x1xf32>
      %c3_142 = arith.constant 3 : index
      %c0_143 = arith.constant 0 : index
      %292 = vector.load %arg13[%c3_142, %c0_143] : memref<4x1xf32, #tpu.memory_space<vmem>>, vector<1x1xf32>
      %c4 = arith.constant 4 : index
      %c0_144 = arith.constant 0 : index
      %293 = vector.load %arg11[%c4, %c0_144] : memref<8x1xf32, #tpu.memory_space<vmem>>, vector<1x1xf32>
      %294 = tpu.iota {dimensions = array<i32: 1>} : vector<1x22xi32>
      %cst_145 = arith.constant 0.000000e+00 : f32
      %295 = vector.broadcast %cst_145 : f32 to vector<1x22xf32>
      %c0_i32_146 = arith.constant 0 : i32
      %296 = vector.broadcast %c0_i32_146 : i32 to vector<1x22xi32>
      %297 = arith.cmpi eq, %294, %296 : vector<1x22xi32>
      %cst_147 = arith.constant 0.000000e+00 : f32
      %298 = vector.shape_cast %272 : vector<1x1xf32> to vector<1x1xf32>
      %299 = vector.broadcast %298 : vector<1x1xf32> to vector<1x22xf32>
      %300 = vector.broadcast %cst_147 : f32 to vector<1x22xf32>
      %301 = arith.select %297, %299, %300 : vector<1x22xi1>, vector<1x22xf32>
      %302 = arith.addf %295, %301 : vector<1x22xf32>
      %c1_i32 = arith.constant 1 : i32
      %303 = vector.broadcast %c1_i32 : i32 to vector<1x22xi32>
      %304 = arith.cmpi eq, %294, %303 : vector<1x22xi32>
      %cst_148 = arith.constant 0.000000e+00 : f32
      %305 = vector.shape_cast %273 : vector<1x1xf32> to vector<1x1xf32>
      %306 = vector.broadcast %305 : vector<1x1xf32> to vector<1x22xf32>
      %307 = vector.broadcast %cst_148 : f32 to vector<1x22xf32>
      %308 = arith.select %304, %306, %307 : vector<1x22xi1>, vector<1x22xf32>
      %309 = arith.addf %302, %308 : vector<1x22xf32>
      %c2_i32 = arith.constant 2 : i32
      %310 = vector.broadcast %c2_i32 : i32 to vector<1x22xi32>
      %311 = arith.cmpi eq, %294, %310 : vector<1x22xi32>
      %cst_149 = arith.constant 0.000000e+00 : f32
      %312 = vector.shape_cast %274 : vector<1x1xf32> to vector<1x1xf32>
      %313 = vector.broadcast %312 : vector<1x1xf32> to vector<1x22xf32>
      %314 = vector.broadcast %cst_149 : f32 to vector<1x22xf32>
      %315 = arith.select %311, %313, %314 : vector<1x22xi1>, vector<1x22xf32>
      %316 = arith.addf %309, %315 : vector<1x22xf32>
      %c3_i32 = arith.constant 3 : i32
      %317 = vector.broadcast %c3_i32 : i32 to vector<1x22xi32>
      %318 = arith.cmpi eq, %294, %317 : vector<1x22xi32>
      %cst_150 = arith.constant 0.000000e+00 : f32
      %319 = vector.shape_cast %275 : vector<1x1xf32> to vector<1x1xf32>
      %320 = vector.broadcast %319 : vector<1x1xf32> to vector<1x22xf32>
      %321 = vector.broadcast %cst_150 : f32 to vector<1x22xf32>
      %322 = arith.select %318, %320, %321 : vector<1x22xi1>, vector<1x22xf32>
      %323 = arith.addf %316, %322 : vector<1x22xf32>
      %c4_i32 = arith.constant 4 : i32
      %324 = vector.broadcast %c4_i32 : i32 to vector<1x22xi32>
      %325 = arith.cmpi eq, %294, %324 : vector<1x22xi32>
      %cst_151 = arith.constant 0.000000e+00 : f32
      %326 = vector.shape_cast %276 : vector<1x1xf32> to vector<1x1xf32>
      %327 = vector.broadcast %326 : vector<1x1xf32> to vector<1x22xf32>
      %328 = vector.broadcast %cst_151 : f32 to vector<1x22xf32>
      %329 = arith.select %325, %327, %328 : vector<1x22xi1>, vector<1x22xf32>
      %330 = arith.addf %323, %329 : vector<1x22xf32>
      %c5_i32 = arith.constant 5 : i32
      %331 = vector.broadcast %c5_i32 : i32 to vector<1x22xi32>
      %332 = arith.cmpi eq, %294, %331 : vector<1x22xi32>
      %cst_152 = arith.constant 0.000000e+00 : f32
      %333 = vector.shape_cast %277 : vector<1x1xf32> to vector<1x1xf32>
      %334 = vector.broadcast %333 : vector<1x1xf32> to vector<1x22xf32>
      %335 = vector.broadcast %cst_152 : f32 to vector<1x22xf32>
      %336 = arith.select %332, %334, %335 : vector<1x22xi1>, vector<1x22xf32>
      %337 = arith.addf %330, %336 : vector<1x22xf32>
      %c6_i32 = arith.constant 6 : i32
      %338 = vector.broadcast %c6_i32 : i32 to vector<1x22xi32>
      %339 = arith.cmpi eq, %294, %338 : vector<1x22xi32>
      %cst_153 = arith.constant 0.000000e+00 : f32
      %340 = vector.shape_cast %278 : vector<1x1xf32> to vector<1x1xf32>
      %341 = vector.broadcast %340 : vector<1x1xf32> to vector<1x22xf32>
      %342 = vector.broadcast %cst_153 : f32 to vector<1x22xf32>
      %343 = arith.select %339, %341, %342 : vector<1x22xi1>, vector<1x22xf32>
      %344 = arith.addf %337, %343 : vector<1x22xf32>
      %c7_i32 = arith.constant 7 : i32
      %345 = vector.broadcast %c7_i32 : i32 to vector<1x22xi32>
      %346 = arith.cmpi eq, %294, %345 : vector<1x22xi32>
      %cst_154 = arith.constant 0.000000e+00 : f32
      %347 = vector.shape_cast %279 : vector<1x1xf32> to vector<1x1xf32>
      %348 = vector.broadcast %347 : vector<1x1xf32> to vector<1x22xf32>
      %349 = vector.broadcast %cst_154 : f32 to vector<1x22xf32>
      %350 = arith.select %346, %348, %349 : vector<1x22xi1>, vector<1x22xf32>
      %351 = arith.addf %344, %350 : vector<1x22xf32>
      %c8_i32 = arith.constant 8 : i32
      %352 = vector.broadcast %c8_i32 : i32 to vector<1x22xi32>
      %353 = arith.cmpi eq, %294, %352 : vector<1x22xi32>
      %cst_155 = arith.constant 0.000000e+00 : f32
      %354 = vector.shape_cast %280 : vector<1x1xf32> to vector<1x1xf32>
      %355 = vector.broadcast %354 : vector<1x1xf32> to vector<1x22xf32>
      %356 = vector.broadcast %cst_155 : f32 to vector<1x22xf32>
      %357 = arith.select %353, %355, %356 : vector<1x22xi1>, vector<1x22xf32>
      %358 = arith.addf %351, %357 : vector<1x22xf32>
      %c9_i32 = arith.constant 9 : i32
      %359 = vector.broadcast %c9_i32 : i32 to vector<1x22xi32>
      %360 = arith.cmpi eq, %294, %359 : vector<1x22xi32>
      %cst_156 = arith.constant 0.000000e+00 : f32
      %361 = vector.shape_cast %281 : vector<1x1xf32> to vector<1x1xf32>
      %362 = vector.broadcast %361 : vector<1x1xf32> to vector<1x22xf32>
      %363 = vector.broadcast %cst_156 : f32 to vector<1x22xf32>
      %364 = arith.select %360, %362, %363 : vector<1x22xi1>, vector<1x22xf32>
      %365 = arith.addf %358, %364 : vector<1x22xf32>
      %c10_i32 = arith.constant 10 : i32
      %366 = vector.broadcast %c10_i32 : i32 to vector<1x22xi32>
      %367 = arith.cmpi eq, %294, %366 : vector<1x22xi32>
      %cst_157 = arith.constant 0.000000e+00 : f32
      %368 = vector.shape_cast %282 : vector<1x1xf32> to vector<1x1xf32>
      %369 = vector.broadcast %368 : vector<1x1xf32> to vector<1x22xf32>
      %370 = vector.broadcast %cst_157 : f32 to vector<1x22xf32>
      %371 = arith.select %367, %369, %370 : vector<1x22xi1>, vector<1x22xf32>
      %372 = arith.addf %365, %371 : vector<1x22xf32>
      %c11_i32 = arith.constant 11 : i32
      %373 = vector.broadcast %c11_i32 : i32 to vector<1x22xi32>
      %374 = arith.cmpi eq, %294, %373 : vector<1x22xi32>
      %cst_158 = arith.constant 0.000000e+00 : f32
      %375 = vector.shape_cast %283 : vector<1x1xf32> to vector<1x1xf32>
      %376 = vector.broadcast %375 : vector<1x1xf32> to vector<1x22xf32>
      %377 = vector.broadcast %cst_158 : f32 to vector<1x22xf32>
      %378 = arith.select %374, %376, %377 : vector<1x22xi1>, vector<1x22xf32>
      %379 = arith.addf %372, %378 : vector<1x22xf32>
      %c12_i32 = arith.constant 12 : i32
      %380 = vector.broadcast %c12_i32 : i32 to vector<1x22xi32>
      %381 = arith.cmpi eq, %294, %380 : vector<1x22xi32>
      %cst_159 = arith.constant 0.000000e+00 : f32
      %382 = vector.shape_cast %284 : vector<1x1xf32> to vector<1x1xf32>
      %383 = vector.broadcast %382 : vector<1x1xf32> to vector<1x22xf32>
      %384 = vector.broadcast %cst_159 : f32 to vector<1x22xf32>
      %385 = arith.select %381, %383, %384 : vector<1x22xi1>, vector<1x22xf32>
      %386 = arith.addf %379, %385 : vector<1x22xf32>
      %c13_i32 = arith.constant 13 : i32
      %387 = vector.broadcast %c13_i32 : i32 to vector<1x22xi32>
      %388 = arith.cmpi eq, %294, %387 : vector<1x22xi32>
      %cst_160 = arith.constant 0.000000e+00 : f32
      %389 = vector.shape_cast %285 : vector<1x1xf32> to vector<1x1xf32>
      %390 = vector.broadcast %389 : vector<1x1xf32> to vector<1x22xf32>
      %391 = vector.broadcast %cst_160 : f32 to vector<1x22xf32>
      %392 = arith.select %388, %390, %391 : vector<1x22xi1>, vector<1x22xf32>
      %393 = arith.addf %386, %392 : vector<1x22xf32>
      %c14_i32 = arith.constant 14 : i32
      %394 = vector.broadcast %c14_i32 : i32 to vector<1x22xi32>
      %395 = arith.cmpi eq, %294, %394 : vector<1x22xi32>
      %cst_161 = arith.constant 0.000000e+00 : f32
      %396 = vector.shape_cast %286 : vector<1x1xf32> to vector<1x1xf32>
      %397 = vector.broadcast %396 : vector<1x1xf32> to vector<1x22xf32>
      %398 = vector.broadcast %cst_161 : f32 to vector<1x22xf32>
      %399 = arith.select %395, %397, %398 : vector<1x22xi1>, vector<1x22xf32>
      %400 = arith.addf %393, %399 : vector<1x22xf32>
      %c15_i32 = arith.constant 15 : i32
      %401 = vector.broadcast %c15_i32 : i32 to vector<1x22xi32>
      %402 = arith.cmpi eq, %294, %401 : vector<1x22xi32>
      %cst_162 = arith.constant 0.000000e+00 : f32
      %403 = vector.shape_cast %287 : vector<1x1xf32> to vector<1x1xf32>
      %404 = vector.broadcast %403 : vector<1x1xf32> to vector<1x22xf32>
      %405 = vector.broadcast %cst_162 : f32 to vector<1x22xf32>
      %406 = arith.select %402, %404, %405 : vector<1x22xi1>, vector<1x22xf32>
      %407 = arith.addf %400, %406 : vector<1x22xf32>
      %c16_i32 = arith.constant 16 : i32
      %408 = vector.broadcast %c16_i32 : i32 to vector<1x22xi32>
      %409 = arith.cmpi eq, %294, %408 : vector<1x22xi32>
      %cst_163 = arith.constant 0.000000e+00 : f32
      %410 = vector.shape_cast %288 : vector<1x1xf32> to vector<1x1xf32>
      %411 = vector.broadcast %410 : vector<1x1xf32> to vector<1x22xf32>
      %412 = vector.broadcast %cst_163 : f32 to vector<1x22xf32>
      %413 = arith.select %409, %411, %412 : vector<1x22xi1>, vector<1x22xf32>
      %414 = arith.addf %407, %413 : vector<1x22xf32>
      %c17_i32 = arith.constant 17 : i32
      %415 = vector.broadcast %c17_i32 : i32 to vector<1x22xi32>
      %416 = arith.cmpi eq, %294, %415 : vector<1x22xi32>
      %cst_164 = arith.constant 0.000000e+00 : f32
      %417 = vector.shape_cast %289 : vector<1x1xf32> to vector<1x1xf32>
      %418 = vector.broadcast %417 : vector<1x1xf32> to vector<1x22xf32>
      %419 = vector.broadcast %cst_164 : f32 to vector<1x22xf32>
      %420 = arith.select %416, %418, %419 : vector<1x22xi1>, vector<1x22xf32>
      %421 = arith.addf %414, %420 : vector<1x22xf32>
      %c18_i32 = arith.constant 18 : i32
      %422 = vector.broadcast %c18_i32 : i32 to vector<1x22xi32>
      %423 = arith.cmpi eq, %294, %422 : vector<1x22xi32>
      %cst_165 = arith.constant 0.000000e+00 : f32
      %424 = vector.shape_cast %290 : vector<1x1xf32> to vector<1x1xf32>
      %425 = vector.broadcast %424 : vector<1x1xf32> to vector<1x22xf32>
      %426 = vector.broadcast %cst_165 : f32 to vector<1x22xf32>
      %427 = arith.select %423, %425, %426 : vector<1x22xi1>, vector<1x22xf32>
      %428 = arith.addf %421, %427 : vector<1x22xf32>
      %c19_i32 = arith.constant 19 : i32
      %429 = vector.broadcast %c19_i32 : i32 to vector<1x22xi32>
      %430 = arith.cmpi eq, %294, %429 : vector<1x22xi32>
      %cst_166 = arith.constant 0.000000e+00 : f32
      %431 = vector.shape_cast %291 : vector<1x1xf32> to vector<1x1xf32>
      %432 = vector.broadcast %431 : vector<1x1xf32> to vector<1x22xf32>
      %433 = vector.broadcast %cst_166 : f32 to vector<1x22xf32>
      %434 = arith.select %430, %432, %433 : vector<1x22xi1>, vector<1x22xf32>
      %435 = arith.addf %428, %434 : vector<1x22xf32>
      %c20_i32 = arith.constant 20 : i32
      %436 = vector.broadcast %c20_i32 : i32 to vector<1x22xi32>
      %437 = arith.cmpi eq, %294, %436 : vector<1x22xi32>
      %cst_167 = arith.constant 0.000000e+00 : f32
      %438 = vector.shape_cast %292 : vector<1x1xf32> to vector<1x1xf32>
      %439 = vector.broadcast %438 : vector<1x1xf32> to vector<1x22xf32>
      %440 = vector.broadcast %cst_167 : f32 to vector<1x22xf32>
      %441 = arith.select %437, %439, %440 : vector<1x22xi1>, vector<1x22xf32>
      %442 = arith.addf %435, %441 : vector<1x22xf32>
      %c21_i32 = arith.constant 21 : i32
      %443 = vector.broadcast %c21_i32 : i32 to vector<1x22xi32>
      %444 = arith.cmpi eq, %294, %443 : vector<1x22xi32>
      %cst_168 = arith.constant 0.000000e+00 : f32
      %445 = vector.shape_cast %293 : vector<1x1xf32> to vector<1x1xf32>
      %446 = vector.broadcast %445 : vector<1x1xf32> to vector<1x22xf32>
      %447 = vector.broadcast %cst_168 : f32 to vector<1x22xf32>
      %448 = arith.select %444, %446, %447 : vector<1x22xi1>, vector<1x22xf32>
      %449 = arith.addf %442, %448 : vector<1x22xf32>
      %450 = vector.shape_cast %449 : vector<1x22xf32> to vector<1x1x1x22xf32>
      %c0_169 = arith.constant 0 : index
      %c0_170 = arith.constant 0 : index
      %c0_171 = arith.constant 0 : index
      %c0_172 = arith.constant 0 : index
      %451 = vector.load %arg5[%c0_169, %c0_170, %c0_171, %c0_172] : memref<1x1x1x22xf32, #tpu.memory_space<vmem>>, vector<1x1x1x22xf32>
      tpu.vector_store %arg5[%c0_169, %c0_170, %c0_171, %c0_172], %450 {strides = array<i32>} : memref<1x1x1x22xf32, #tpu.memory_space<vmem>>, vector<1x1x1x22xf32>,
    } else {
    }
    return
  }
  func.func @transform_0(%arg0: i32, %arg1: i32, %arg2: i32) -> (i32, i32, i32) {
    %c1_i32 = arith.constant 1 : i32
    %0 = arith.muli %arg0, %c1_i32 : i32
    %1 = arith.addi %0, %arg2 : i32
    %c0_i32 = arith.constant 0 : i32
    %c0_i32_0 = arith.constant 0 : i32
    return %arg1, %c0_i32, %1 : i32, i32, i32
  }
  func.func @transform_1(%arg0: i32, %arg1: i32, %arg2: i32) -> (i32, i32, i32) {
    %c1_i32 = arith.constant 1 : i32
    %0 = arith.muli %arg0, %c1_i32 : i32
    %1 = arith.addi %0, %arg2 : i32
    %c0_i32 = arith.constant 0 : i32
    %c0_i32_0 = arith.constant 0 : i32
    return %arg1, %c0_i32, %1 : i32, i32, i32
  }
  func.func @transform_2(%arg0: i32, %arg1: i32, %arg2: i32) -> (i32, i32, i32, i32) {
    %c0_i32 = arith.constant 0 : i32
    %c0_i32_0 = arith.constant 0 : i32
    %c0_i32_1 = arith.constant 0 : i32
    return %arg0, %arg1, %c0_i32, %c0_i32_0 : i32, i32, i32, i32
  }
}

</mosaic_0001>

<llo_original>
// kernel: tpu_custom_call.1
$region0: #{tpu_custom_call.1}
  #allocation0 [shape = 'u32[]', space=smem, size = 0x4, offset = 0x4, fixed_abs, tag = 'smem constant byte address 0x4 - core index']
  #allocation1 [shape = 'u32[144,128]{1,0:T(1,128)}', space=vmem, size = 0x12000, scoped, tag = 'internal scratch']
  #allocation2 [shape = 'f32[8,1]{1,0:T(8,128)}', space=vmem, size = 0x1000, scoped, tag = 'scratch operand']
  #allocation3 [shape = 'f32[8,1]{1,0:T(8,128)}', space=vmem, size = 0x1000, scoped, tag = 'scratch operand']
  #allocation4 [shape = 'f32[8,1]{1,0:T(8,128)}', space=vmem, size = 0x1000, scoped, tag = 'scratch operand']
  #allocation5 [shape = 'f32[4,1]{1,0:T(4,128)}', space=vmem, size = 0x800, scoped, tag = 'scratch operand']
  #allocation6 [shape = 'f32[8,1]{1,0:T(8,128)}', space=vmem, size = 0x1000, scoped, tag = 'scratch operand']
  #allocation7 [shape = 'f32[8,1]{1,0:T(8,128)}', space=vmem, size = 0x1000, scoped, tag = 'scratch operand']
  #allocation8 [shape = 'f32[8,1]{1,0:T(8,128)}', space=vmem, size = 0x1000, scoped, tag = 'scratch operand']
  #allocation9 [shape = 'f32[4,1]{1,0:T(4,128)}', space=vmem, size = 0x800, scoped, tag = 'scratch operand']
  %s0 = inlined_call_operand.hbm [shape: f32[2,16,256], index: 0, kind: input, shape index: {}]
  %s1 = inlined_call_operand.hbm [shape: f32[2,16,256], index: 1, kind: input, shape index: {}]
  %s2 = inlined_call_operand.hbm [shape: f32[1,2,1,22], index: 2, kind: output, shape index: {}]
  %s3 = sld [smem:[#allocation0]]
  $region57: #{tpu_custom_call.1} parent=0
    _
  %s5 = ssub.s32 1, %s3
  %s6 = scalar_select 0, %s5, %s3
  $region1: #{tpu_custom_call.1} parent=0
    #allocation10 [shape = 'u8[32768]{0}', space=vmem, size = 0x8000, scoped, tag = 'input window, operand 0']
    #allocation11 [shape = 's32[2]{0}', space=sflag, size = 0x8, scoped, tag = 'scoped memory for tpu_custom_call.1']
    #allocation12 [shape = 's32[2]{0}', space=sflag, size = 0x8, scoped, tag = 'scoped memory for tpu_custom_call.1']
    #allocation13 [shape = 'u8[32768]{0}', space=vmem, size = 0x8000, scoped, tag = 'input window, operand 1']
    #allocation14 [shape = 's32[2]{0}', space=sflag, size = 0x8, scoped, tag = 'scoped memory for tpu_custom_call.1']
    #allocation15 [shape = 'u8[1024]{0}', space=vmem, size = 0x400, scoped, tag = 'output window, operand 0']
    %7 = vsyncpa [#allocation11], 0
    %s8 = scalar_lea.sflag [#allocation11], 1
    %9 = vsyncpa %s8, 0
    %10 = vsyncpa [#allocation14], 0
    %s11 = scalar_lea.sflag [#allocation14], 1
    %12 = vsyncpa %s11, 0
    %13 = vsyncpa [#allocation12], 0
    %s14 = scalar_lea.sflag [#allocation12], 1
    %15 = vsyncpa %s14, 0
    loop: start=0, step=1, limit=4
    $region2: #{tpu_custom_call.1} parent=1 // loop_pre_header
      _
    $region3: #{tpu_custom_call.1} parent=1 // loop_header
      %s17 = sphi 0, %s21
      %p18 = scmp.ge.s32.totalorder %s17, 4
      %s24 = sphi 0, %s43
      %s25 = sphi 0, %s39
      %s26 = sphi 0, %s35
      %s27 = sphi 0, %s24
      %s28 = sphi 0, %s25
      %s29 = sphi 0, %s26
      %s30 = sphi 0, %s27
      %s31 = sphi 0, %s28
      %s32 = sphi 0, %s29
      %s50 = sphi 0, %s52
      %s53 = sphi 0, %s50
      %s54 = sphi 0, %s53
      %s70 = sphi 0, %s54
      %s80 = sphi 0, %s82
      %s83 = sphi 0, %s80
      %s84 = sphi 0, %s83
      %s100 = sphi 0, %s84
      %s108 = sphi 0, %s110
      %s111 = sphi 0, %s108
      %s112 = sphi 0, %s111
      %s128 = sphi 0, %s112
    $region4: #{tpu_custom_call.1} parent=1 // loop_header_branch
      %20 = sbr.rel (%p18) target = $region8
    $region5: #{tpu_custom_call.1} parent=1 // loop_body
      %s22 = ssub.s32 %s17, 1
      %s23 = ssub.s32 %s17, 2
      %s33 = sadd.s32 1, %s26
      %p34 = scmp.ge.s32.totalorder %s33, 1
      %s35 = scalar_select %p34, 0, %s33
      %s36 = sadd.s32 1, %s25
      %s37 = scalar_select %p34, %s36, %s25
      %p38 = scmp.ge.s32.totalorder %s37, 2
      %s39 = scalar_select %p38, 0, %s37
      %s40 = sadd.s32 1, %s24
      %s41 = scalar_select %p38, %s40, %s24
      %p42 = scmp.ge.s32.totalorder %s41, 1
      %s43 = scalar_select %p42, 0, %s41
      %s44 = sadd.s32 %s24, %s26
      %s45 = sadd.s32 %s43, %s35
      %s46 = ssub.s32 %s25, %s39
      %s47 = ssub.s32 %s44, %s45
      %s48 = sor.u32 %s46, %s47
      %p49 = scmp.eq.s32.totalorder %s48, 0
      %s51 = sadd.s32 %s50, 1
      %s52 = scalar_select %p49, %s50, %s51
      %p55 = pneg %p49
      %p56 = scmp.eq.s32.totalorder %s17, 1
      %p57 = por %p55, %p56
      %p58 = scmp.ne.s32.totalorder %s50, %s53
      %p59 = scmp.eq.s32.totalorder %s17, 0
      %p60 = por %p58, %p59
      %p61 = scmp.ne.s32.totalorder %s50, %s53
      %p62 = scmp.eq.s32.totalorder %s22, 1
      %p63 = por %p61, %p62
      %p64 = scmp.ne.s32.totalorder %s53, %s54
      %p65 = scmp.eq.s32.totalorder %s22, 0
      %p66 = por %p64, %p65
      %p67 = scmp.ne.s32.totalorder %s53, %s54
      %p68 = scmp.eq.s32.totalorder %s23, 1
      %p69 = por %p67, %p68
      %p71 = scmp.ne.s32.totalorder %s54, %s70
      %p72 = scmp.eq.s32.totalorder %s23, 0
      %p73 = por %p71, %p72
      %s74 = sadd.s32 %s24, %s26
      %s75 = sadd.s32 %s43, %s35
      %s76 = ssub.s32 %s25, %s39
      %s77 = ssub.s32 %s74, %s75
      %s78 = sor.u32 %s76, %s77
      %p79 = scmp.eq.s32.totalorder %s78, 0
      %s81 = sadd.s32 %s80, 1
      %s82 = scalar_select %p79, %s80, %s81
      %p85 = pneg %p79
      %p86 = scmp.eq.s32.totalorder %s17, 1
      %p87 = por %p85, %p86
      %p88 = scmp.ne.s32.totalorder %s80, %s83
      %p89 = scmp.eq.s32.totalorder %s17, 0
      %p90 = por %p88, %p89
      %p91 = scmp.ne.s32.totalorder %s80, %s83
      %p92 = scmp.eq.s32.totalorder %s22, 1
      %p93 = por %p91, %p92
      %p94 = scmp.ne.s32.totalorder %s83, %s84
      %p95 = scmp.eq.s32.totalorder %s22, 0
      %p96 = por %p94, %p95
      %p97 = scmp.ne.s32.totalorder %s83, %s84
      %p98 = scmp.eq.s32.totalorder %s23, 1
      %p99 = por %p97, %p98
      %p101 = scmp.ne.s32.totalorder %s84, %s100
      %p102 = scmp.eq.s32.totalorder %s23, 0
      %p103 = por %p101, %p102
      %s104 = ssub.s32 %s24, %s43
      %s105 = ssub.s32 %s25, %s39
      %s106 = sor.u32 %s104, %s105
      %p107 = scmp.eq.s32.totalorder %s106, 0
      %s109 = sadd.s32 %s108, 1
      %s110 = scalar_select %p107, %s108, %s109
      %p113 = pneg %p107
      %p114 = scmp.eq.s32.totalorder %s17, 1
      %p115 = por %p113, %p114
      %p116 = scmp.ne.s32.totalorder %s108, %s111
      %p117 = scmp.eq.s32.totalorder %s17, 0
      %p118 = por %p116, %p117
      %p119 = scmp.ne.s32.totalorder %s108, %s111
      %p120 = scmp.eq.s32.totalorder %s22, 1
      %p121 = por %p119, %p120
      %p122 = scmp.ne.s32.totalorder %s111, %s112
      %p123 = scmp.eq.s32.totalorder %s22, 0
      %p124 = por %p122, %p123
      %p125 = scmp.ne.s32.totalorder %s111, %s112
      %p126 = scmp.eq.s32.totalorder %s23, 1
      %p127 = por %p125, %p126
      %p129 = scmp.ne.s32.totalorder %s112, %s128
      %p130 = scmp.eq.s32.totalorder %s23, 0
      %p131 = por %p129, %p130
      %p132 = scmp.le.s32.totalorder 1, %s17
      %p133 = scmp.lt.s32.totalorder %s17, 3
      %p134 = pnand %p132, %p133
      %p135 = pneg %p134
      // Predicated region
      $region9: #{tpu_custom_call.1} parent=5 // pred_check
        _
      $region10: #{tpu_custom_call.1} parent=5 // pred_check_branch
        %137 = sbr.rel (%p134) target = $region12
      $region11: #{tpu_custom_call.1} parent=5 // pred_region
        %s138 = ssub.s32 %s17, 1
      $region12: #{tpu_custom_call.1} parent=5 // pred_fallthru
        _
      %p139 = scmp.lt.s32.totalorder %s17, 2
      // Predicated region
      $region13: #{tpu_custom_call.1} parent=5 // pred_check
        %p140 = pneg %p139
      $region14: #{tpu_custom_call.1} parent=5 // pred_check_branch
        %142 = sbr.rel (%p140) target = $region16
      $region15: #{tpu_custom_call.1} parent=5 // pred_region
        // Predicated region
        $region17: #{tpu_custom_call.1} parent=15 // pred_check
          %p143 = pneg %p60
        $region18: #{tpu_custom_call.1} parent=15 // pred_check_branch
          %145 = sbr.rel (%p143) target = $region20
        $region19: #{tpu_custom_call.1} parent=15 // pred_region
          %s146 = sand.u32 %s50, 1
          %s147 = scalar_lea.sflag [#allocation11], %s146
          %s148 = sand.u32 %s50, 1
          %s149 = smul.addr %s148, 32
          %s150 = scalar_lea.vmem [#allocation10], %s149
          %s151 = sadd.s32 %s24, %s26
          %s152 = smul.u32 2, %s151
          %s154 = ssub.s32 512, 512
          %155 = vsyncadd %s147, %s154
          %s156 = smul.addr %s25, 4
          %s157 = sadd.s32 %s152, %s156
          %s158 = smul.addr %s157, 128
          %s159 = scalar_lea.hbm %s0, %s158
          %s160 = sshll.u32 %s150, 4
          %s161 = int_to_ptr.vmem [resolvable:$true] %s160
          %166 = dma.hbm_to_vmem [thread:$0]  %s159, 512, %s161, %s147, 256, 256, 16
        $region20: #{tpu_custom_call.1} parent=15 // pred_fallthru
          _
        // Predicated region
        $region21: #{tpu_custom_call.1} parent=15 // pred_check
          %p167 = pneg %p90
        $region22: #{tpu_custom_call.1} parent=15 // pred_check_branch
          %169 = sbr.rel (%p167) target = $region24
        $region23: #{tpu_custom_call.1} parent=15 // pred_region
          %s170 = sand.u32 %s80, 1
          %s171 = scalar_lea.sflag [#allocation14], %s170
          %s172 = sand.u32 %s80, 1
          %s173 = smul.addr %s172, 32
          %s174 = scalar_lea.vmem [#allocation13], %s173
          %s175 = sadd.s32 %s24, %s26
          %s176 = smul.u32 2, %s175
          %s178 = ssub.s32 512, 512
          %179 = vsyncadd %s171, %s178
          %s180 = smul.addr %s25, 4
          %s181 = sadd.s32 %s176, %s180
          %s182 = smul.addr %s181, 128
          %s183 = scalar_lea.hbm %s1, %s182
          %s184 = sshll.u32 %s174, 4
          %s185 = int_to_ptr.vmem [resolvable:$true] %s184
          %190 = dma.hbm_to_vmem [thread:$0]  %s183, 512, %s185, %s171, 256, 256, 16
        $region24: #{tpu_custom_call.1} parent=15 // pred_fallthru
          _
      $region16: #{tpu_custom_call.1} parent=5 // pred_fallthru
        _
      %p191 = scmp.le.s32.totalorder 1, %s17
      %p192 = scmp.lt.s32.totalorder %s17, 3
      %p193 = pnand %p191, %p192
      %p194 = pneg %p193
      // Predicated region
      $region25: #{tpu_custom_call.1} parent=5 // pred_check
        _
      $region26: #{tpu_custom_call.1} parent=5 // pred_check_branch
        %196 = sbr.rel (%p193) target = $region28
      $region27: #{tpu_custom_call.1} parent=5 // pred_region
        %s197 = ssub.s32 %s17, 1
        %s198 = sand.u32 %s53, 1
        %s199 = scalar_lea.sflag [#allocation11], %s198
        %s200 = sand.u32 %s53, 1
        %s201 = smul.addr %s200, 32
        %s202 = scalar_lea.vmem [#allocation10], %s201
        // Predicated region
        $region29: #{tpu_custom_call.1} parent=27 // pred_check
          %p203 = pneg %p66
        $region30: #{tpu_custom_call.1} parent=27 // pred_check_branch
          %205 = sbr.rel (%p203) target = $region32
        $region31: #{tpu_custom_call.1} parent=27 // pred_region
          %206 = dma.done %s199, 512
        $region32: #{tpu_custom_call.1} parent=27 // pred_fallthru
          _
        %s207 = sand.u32 %s83, 1
        %s208 = scalar_lea.sflag [#allocation14], %s207
        %s209 = sand.u32 %s83, 1
        %s210 = smul.addr %s209, 32
        %s211 = scalar_lea.vmem [#allocation13], %s210
        // Predicated region
        $region33: #{tpu_custom_call.1} parent=27 // pred_check
          %p212 = pneg %p96
        $region34: #{tpu_custom_call.1} parent=27 // pred_check_branch
          %214 = sbr.rel (%p212) target = $region36
        $region35: #{tpu_custom_call.1} parent=27 // pred_region
          %215 = dma.done %s208, 512
        $region36: #{tpu_custom_call.1} parent=27 // pred_fallthru
          _
        %s216 = sand.u32 %s53, 1
        %s217 = scalar_lea.sflag [#allocation11], %s216
        %s218 = sand.u32 %s53, 1
        %s219 = smul.addr %s218, 32
        %s220 = scalar_lea.vmem [#allocation10], %s219
        %p221 = pneg %p66
        %p222 = pneg %p63
        %s223 = sand.u32 %s83, 1
        %s224 = scalar_lea.sflag [#allocation14], %s223
        %s225 = sand.u32 %s83, 1
        %s226 = smul.addr %s225, 32
        %s227 = scalar_lea.vmem [#allocation13], %s226
        %p228 = pneg %p96
        %p229 = pneg %p93
        %p230 = pneg %p124
        %p231 = pneg %p121
        %s232 = sand.u32 %s111, 1
        %s233 = scalar_lea.sflag [#allocation12], %s232
        %s234 = sand.u32 %s111, 1
        %s235 = scalar_lea.vmem [#allocation15], %s234
        %s236 = sadd.s32 %s27, %s29
        %s237 = smul.u32 2, %s236
        %s238 = sadd.s32 %s27, %s29
        %s239 = smul.u32 2, %s238
        %p240 = scmp.eq.s32.totalorder %s29, 0
        // Predicated region
        $region37: #{tpu_custom_call.1} parent=27 // pred_check
          %p241 = pneg %p240
        $region38: #{tpu_custom_call.1} parent=27 // pred_check_branch
          %243 = sbr.rel (%p241) target = $region40
        $region39: #{tpu_custom_call.1} parent=27 // pred_region
          %vm244 = vcmask 7168
          %245 = vst.msk [vmem:[#allocation2] sm:$0xff] %vm244, 0.0
          %246 = vst.msk [vmem:[#allocation3] sm:$0xff] %vm244, 0.0
          %247 = vst.msk [vmem:[#allocation4] sm:$0xff] %vm244, 0.0
          %vm248 = vcmask 3072
          %249 = vst.msk [vmem:[#allocation5] sm:$0xf] %vm248, 0.0
          %250 = vst.msk [vmem:[#allocation6] sm:$0xff] %vm244, 0.0
          %251 = vst.msk [vmem:[#allocation7] sm:$0xff] %vm244, 0.0
          %252 = vst.msk [vmem:[#allocation8] sm:$0xff] %vm244, 0.0
          %253 = vst.msk [vmem:[#allocation9] sm:$0xf] %vm248, 0.0
        $region40: #{tpu_custom_call.1} parent=27 // pred_fallthru
          _
        %v254 = vld [vmem:[%s202] sm:$0xff]
        %v255 = vld [vmem:[%s202 + $0x8] sm:$0xff]
        %v256 = vld [vmem:[%s211] sm:$0xff]
        %v257 = vld [vmem:[%s211 + $0x8] sm:$0xff]
        %vm258 = vcmp.ne.f32.partialorder %v256, 0.0
        %vm259 = vcmp.ne.f32.partialorder %v257, 0.0
        %v260 = vsel %vm258, 1, 0
        %v261 = vsel %vm259, 1, 0
        %v262 = vcvt.s32.f32 %v260
        %v263 = vcvt.s32.f32 %v261
        %v264 = vmax.f32 %v254, 0.0
        %v265 = vmax.f32 %v255, 0.0
        %v266 = vmul.f32 %v254, %v256
        %v267 = vmul.f32 %v255, %v257
        %v268 = vsub.f32 %v264, %v266
        %v269 = vsub.f32 %v265, %v267
        %v270 = vand.u32 2147483647, %v254
        %v271 = vand.u32 2147483647, %v255
        %v272 = vsub.f32 0.0, %v270
        %v273 = vsub.f32 0.0, %v271
        %v274 = vmul.f32 %v272, 1.442695
        %v275 = vpow.pop %v274
        %v276 = vmul.f32 %v273, 1.442695
        %v277 = vpow.pop %v276
        %v278 = vadd.f32 %v275, 1.0
        %v279 = vadd.f32 %v277, 1.0
        %v280 = vlog2.pop %v278
        %v281 = vmul.f32 %v280, 0.6931472
        %v282 = vlog2.pop %v279
        %v283 = vmul.f32 %v282, 0.6931472
        %v284 = vadd.f32 %v268, %v281
        %v285 = vadd.f32 %v269, %v283
        %v286 = vmul.f32 %v284, %v262
        %v287 = vmul.f32 %v285, %v263
        %v288 = vadd.f32 %v286, %v287
        %289 = vadd.xlane.f32.xlu0 %v288
        %v290 = vpop.xlane.xlu0 %289
        %v291 = vadd.f32 %v262, %v263
        %292 = vadd.xlane.f32.xlu0 %v291
        %v293 = vpop.xlane.xlu0 %292
        %v294 = vadd.f32 %v284, %v285
        %295 = vadd.xlane.f32.xlu0 %v294
        %v296 = vpop.xlane.xlu0 %295
        %v297 = vand.u32 2147483647, %v256
        %v298 = vand.u32 2147483647, %v257
        %v301 = vrot.slane %v297, 1
        %v302 = vrot.slane %v298, 1
        %vm305 = vcmask 1041408
        %v306 = vsel %vm305, %v301, 0.0
        %v307 = vrot.slane %v306, 4
        %v308 = vadd.f32 %v306, %v307
        %v309 = vrot.slane %v308, 2
        %v310 = vadd.f32 %v308, %v309
        %v311 = vrot.slane %v310, 1
        %v312 = vadd.f32 %v310, %v311
        %v313 = vsel %vm305, %v302, 0.0
        %v314 = vrot.slane %v313, 4
        %v315 = vadd.f32 %v313, %v314
        %v316 = vrot.slane %v315, 2
        %v317 = vadd.f32 %v315, %v316
        %v318 = vrot.slane %v317, 1
        %v319 = vadd.f32 %v317, %v318
        %v320 = vrot.slane %v297, 3
        %v321 = vrot.slane %v298, 3
        %v324 = vsel %vm305, %v320, 0.0
        %v325 = vrot.slane %v324, 4
        %v326 = vadd.f32 %v324, %v325
        %v327 = vrot.slane %v326, 2
        %v328 = vadd.f32 %v326, %v327
        %v329 = vrot.slane %v328, 1
        %v330 = vadd.f32 %v328, %v329
        %v331 = vsel %vm305, %v321, 0.0
        %v332 = vrot.slane %v331, 4
        %v333 = vadd.f32 %v331, %v332
        %v334 = vrot.slane %v333, 2
        %v335 = vadd.f32 %v333, %v334
        %v336 = vrot.slane %v335, 1
        %v337 = vadd.f32 %v335, %v336
        %v338 = vadd.f32 %v312, %v330
        %v339 = vadd.f32 %v319, %v337
        %vm340 = vcmp.ne.f32.partialorder %v338, 0.0
        %vm341 = vcmp.ne.f32.partialorder %v339, 0.0
        %v342 = vsel %vm340, 1, 0
        %v343 = vsel %vm341, 1, 0
        %v344 = vcvt.s32.f32 %v342
        %v345 = vcvt.s32.f32 %v343
        %v346 = vsub.f32 %v254, %v256
        %v347 = vsub.f32 %v255, %v257
        %v348 = vand.u32 2147483647, %v346
        %v349 = vand.u32 2147483647, %v347
        %vm350 = vcmp.lt.f32.partialorder %v348, 1.0
        %vm351 = vcmp.lt.f32.partialorder %v349, 1.0
        %v352 = vmul.f32 %v346, 0.5
        %v353 = vmul.f32 %v347, 0.5
        %v354 = vmul.f32 %v352, %v346
        %v355 = vmul.f32 %v353, %v347
        %v356 = vsub.f32 %v348, 0.5
        %v357 = vsub.f32 %v349, 0.5
        %v358 = vsel %vm350, %v354, %v356
        %v359 = vsel %vm351, %v355, %v357
        %v362 = vrot.slane %v358, 2
        %v363 = vrot.slane %v359, 2
        %v366 = vadd.f32 %v358, %v362
        %v367 = vadd.f32 %v359, %v363
        %v370 = vrot.slane %v366, 1
        %v371 = vrot.slane %v367, 1
        %v374 = vsel %vm305, %v370, 0.0
        %v375 = vrot.slane %v374, 4
        %v376 = vadd.f32 %v374, %v375
        %v377 = vrot.slane %v376, 2
        %v378 = vadd.f32 %v376, %v377
        %v379 = vrot.slane %v378, 1
        %v380 = vadd.f32 %v378, %v379
        %v381 = vsel %vm305, %v371, 0.0
        %v382 = vrot.slane %v381, 4
        %v383 = vadd.f32 %v381, %v382
        %v384 = vrot.slane %v383, 2
        %v385 = vadd.f32 %v383, %v384
        %v386 = vrot.slane %v385, 1
        %v387 = vadd.f32 %v385, %v386
        %v390 = vrot.slane %v256, 6
        %v391 = vrot.slane %v257, 6
        %v394 = vsub.f32 %v254, %v390
        %v395 = vsub.f32 %v255, %v391
        %v396 = vand.u32 2147483647, %v394
        %v397 = vand.u32 2147483647, %v395
        %vm398 = vcmp.lt.f32.partialorder %v396, 1.0
        %vm399 = vcmp.lt.f32.partialorder %v397, 1.0
        %v400 = vmul.f32 %v394, 0.5
        %v401 = vmul.f32 %v395, 0.5
        %v402 = vmul.f32 %v400, %v394
        %v403 = vmul.f32 %v401, %v395
        %v404 = vsub.f32 %v396, 0.5
        %v405 = vsub.f32 %v397, 0.5
        %v406 = vsel %vm398, %v402, %v404
        %v407 = vsel %vm399, %v403, %v405
        %v408 = vrot.slane %v256, 2
        %v409 = vrot.slane %v257, 2
        %v412 = vsub.f32 %v254, %v408
        %v413 = vsub.f32 %v255, %v409
        %v414 = vand.u32 2147483647, %v412
        %v415 = vand.u32 2147483647, %v413
        %vm416 = vcmp.lt.f32.partialorder %v414, 1.0
        %vm417 = vcmp.lt.f32.partialorder %v415, 1.0
        %v418 = vmul.f32 %v412, 0.5
        %v419 = vmul.f32 %v413, 0.5
        %v420 = vmul.f32 %v418, %v412
        %v421 = vmul.f32 %v419, %v413
        %v422 = vsub.f32 %v414, 0.5
        %v423 = vsub.f32 %v415, 0.5
        %v424 = vsel %vm416, %v420, %v422
        %v425 = vsel %vm417, %v421, %v423
        %v428 = vrot.slane %v424, 6
        %v429 = vrot.slane %v425, 6
        %v432 = vadd.f32 %v406, %v428
        %v433 = vadd.f32 %v407, %v429
        %v436 = vrot.slane %v432, 3
        %v437 = vrot.slane %v433, 3
        %v440 = vsel %vm305, %v436, 0.0
        %v441 = vrot.slane %v440, 4
        %v442 = vadd.f32 %v440, %v441
        %v443 = vrot.slane %v442, 2
        %v444 = vadd.f32 %v442, %v443
        %v445 = vrot.slane %v444, 1
        %v446 = vadd.f32 %v444, %v445
        %v447 = vsel %vm305, %v437, 0.0
        %v448 = vrot.slane %v447, 4
        %v449 = vadd.f32 %v447, %v448
        %v450 = vrot.slane %v449, 2
        %v451 = vadd.f32 %v449, %v450
        %v452 = vrot.slane %v451, 1
        %v453 = vadd.f32 %v451, %v452
        %v454 = vmin.f32 %v380, %v446
        %v455 = vmin.f32 %v387, %v453
        %v456 = vmul.f32 %v454, %v344
        %v457 = vmul.f32 %v455, %v345
        %v458 = vadd.f32 %v456, %v457
        %459 = vadd.xlane.f32.xlu0 %v458
        %v460 = vpop.xlane.xlu0 %459
        %v461 = vadd.f32 %v344, %v345
        %462 = vadd.xlane.f32.xlu0 %v461
        %v463 = vpop.xlane.xlu0 %462
        %v464 = vxor.u32 %v254, 2147483648
        %v465 = vxor.u32 %v255, 2147483648
        %v466 = vmul.f32 %v464, 1.442695
        %v467 = vpow.pop %v466
        %v468 = vmul.f32 %v465, 1.442695
        %v469 = vpow.pop %v468
        %v470 = vadd.f32 %v467, 1.0
        %v471 = vadd.f32 %v469, 1.0
        %v472 = vrcp.pop %v470
        %v473 = vmul.f32 1.0, %v472
        %v474 = vrcp.pop %v471
        %v475 = vmul.f32 1.0, %v474
        %v476 = vsub.f32 %v473, %v256
        %v477 = vsub.f32 %v475, %v257
        %v478 = vand.u32 2147483647, %v476
        %v479 = vand.u32 2147483647, %v477
        %vm480 = vcmp.lt.f32.partialorder %v478, 1.0
        %vm481 = vcmp.lt.f32.partialorder %v479, 1.0
        %v482 = vmul.f32 %v476, 0.5
        %v483 = vmul.f32 %v477, 0.5
        %v484 = vmul.f32 %v482, %v476
        %v485 = vmul.f32 %v483, %v477
        %v486 = vsub.f32 %v478, 0.5
        %v487 = vsub.f32 %v479, 0.5
        %v488 = vsel %vm480, %v484, %v486
        %v489 = vsel %vm481, %v485, %v487
        %v490 = vlaneseq
        %v491 = vshrl.u32 %v490, 7
        %v492 = vsub.s32 5, %v491
        %v493 = vrot.slane %v262, %v492
        %v494 = vlaneseq
        %v495 = vshrl.u32 %v494, 7
        %v496 = vsub.s32 5, %v495
        %v497 = vrot.slane %v263, %v496
        %v498 = vmul.f32 %v488, %v493
        %v499 = vmul.f32 %v489, %v497
        %vm500 = vcmask 1046533
        %v501 = vsel %vm500, %v498, 0.0
        %v502 = vsel %vm500, %v499, 0.0
        %v503 = vadd.f32 %v501, %v502
        %504 = vadd.xlane.f32.xlu0 %v503
        %v505 = vpop.xlane.xlu0 %504
        %v507 = vrot.slane %v505, 3
        %vm509 = vcmask 1040384
        %v510 = vsel %vm509, %v460, %v463
        %v511 = vsel %vm305, %v510, %v507
        %v512 = vld [vmem:[%s202 + $0x10] sm:$0xff]
        %v513 = vld [vmem:[%s202 + $0x18] sm:$0xff]
        %v514 = vld [vmem:[%s211 + $0x10] sm:$0xff]
        %v515 = vld [vmem:[%s211 + $0x18] sm:$0xff]
        %vm516 = vcmp.ne.f32.partialorder %v514, 0.0
        %vm517 = vcmp.ne.f32.partialorder %v515, 0.0
        %v518 = vsel %vm516, 1, 0
        %v519 = vsel %vm517, 1, 0
        %v520 = vcvt.s32.f32 %v518
        %v521 = vcvt.s32.f32 %v519
        %v522 = vmax.f32 %v512, 0.0
        %v523 = vmax.f32 %v513, 0.0
        %v524 = vmul.f32 %v512, %v514
        %v525 = vmul.f32 %v513, %v515
        %v526 = vsub.f32 %v522, %v524
        %v527 = vsub.f32 %v523, %v525
        %v528 = vand.u32 2147483647, %v512
        %v529 = vand.u32 2147483647, %v513
        %v530 = vsub.f32 0.0, %v528
        %v531 = vsub.f32 0.0, %v529
        %v532 = vmul.f32 %v530, 1.442695
        %v533 = vpow.pop %v532
        %v534 = vmul.f32 %v531, 1.442695
        %v535 = vpow.pop %v534
        %v536 = vadd.f32 %v533, 1.0
        %v537 = vadd.f32 %v535, 1.0
        %v538 = vlog2.pop %v536
        %v539 = vmul.f32 %v538, 0.6931472
        %v540 = vlog2.pop %v537
        %v541 = vmul.f32 %v540, 0.6931472
        %v542 = vadd.f32 %v526, %v539
        %v543 = vadd.f32 %v527, %v541
        %v544 = vmul.f32 %v542, %v520
        %v545 = vmul.f32 %v543, %v521
        %v546 = vadd.f32 %v544, %v545
        %547 = vadd.xlane.f32.xlu0 %v546
        %v548 = vpop.xlane.xlu0 %547
        %v549 = vadd.f32 %v520, %v521
        %550 = vadd.xlane.f32.xlu0 %v549
        %v551 = vpop.xlane.xlu0 %550
        %v552 = vadd.f32 %v542, %v543
        %553 = vadd.xlane.f32.xlu0 %v552
        %v554 = vpop.xlane.xlu0 %553
        %v555 = vand.u32 2147483647, %v514
        %v556 = vand.u32 2147483647, %v515
        %v557 = vsel %vm305, %v555, 0.0
        %v558 = vrot.slane %v557, 4
        %v559 = vadd.f32 %v557, %v558
        %v560 = vrot.slane %v559, 2
        %v561 = vadd.f32 %v559, %v560
        %v562 = vrot.slane %v561, 1
        %v563 = vadd.f32 %v561, %v562
        %v564 = vsel %vm305, %v556, 0.0
        %v565 = vrot.slane %v564, 4
        %v566 = vadd.f32 %v564, %v565
        %v567 = vrot.slane %v566, 2
        %v568 = vadd.f32 %v566, %v567
        %v569 = vrot.slane %v568, 1
        %v570 = vadd.f32 %v568, %v569
        %v573 = vrot.slane %v555, 2
        %v574 = vrot.slane %v556, 2
        %v577 = vsel %vm305, %v573, 0.0
        %v578 = vrot.slane %v577, 4
        %v579 = vadd.f32 %v577, %v578
        %v580 = vrot.slane %v579, 2
        %v581 = vadd.f32 %v579, %v580
        %v582 = vrot.slane %v581, 1
        %v583 = vadd.f32 %v581, %v582
        %v584 = vsel %vm305, %v574, 0.0
        %v585 = vrot.slane %v584, 4
        %v586 = vadd.f32 %v584, %v585
        %v587 = vrot.slane %v586, 2
        %v588 = vadd.f32 %v586, %v587
        %v589 = vrot.slane %v588, 1
        %v590 = vadd.f32 %v588, %v589
        %v591 = vadd.f32 %v563, %v583
        %v592 = vadd.f32 %v570, %v590
        %vm593 = vcmp.ne.f32.partialorder %v591, 0.0
        %vm594 = vcmp.ne.f32.partialorder %v592, 0.0
        %v595 = vsel %vm593, 1, 0
        %v596 = vsel %vm594, 1, 0
        %v597 = vcvt.s32.f32 %v595
        %v598 = vcvt.s32.f32 %v596
        %v599 = vsub.f32 %v512, %v514
        %v600 = vsub.f32 %v513, %v515
        %v601 = vand.u32 2147483647, %v599
        %v602 = vand.u32 2147483647, %v600
        %vm603 = vcmp.lt.f32.partialorder %v601, 1.0
        %vm604 = vcmp.lt.f32.partialorder %v602, 1.0
        %v605 = vmul.f32 %v599, 0.5
        %v606 = vmul.f32 %v600, 0.5
        %v607 = vmul.f32 %v605, %v599
        %v608 = vmul.f32 %v606, %v600
        %v609 = vsub.f32 %v601, 0.5
        %v610 = vsub.f32 %v602, 0.5
        %v611 = vsel %vm603, %v607, %v609
        %v612 = vsel %vm604, %v608, %v610
        %v615 = vrot.slane %v611, 2
        %v616 = vrot.slane %v612, 2
        %v619 = vadd.f32 %v611, %v615
        %v620 = vadd.f32 %v612, %v616
        %v621 = vsel %vm305, %v619, 0.0
        %v622 = vrot.slane %v621, 4
        %v623 = vadd.f32 %v621, %v622
        %v624 = vrot.slane %v623, 2
        %v625 = vadd.f32 %v623, %v624
        %v626 = vrot.slane %v625, 1
        %v627 = vadd.f32 %v625, %v626
        %v628 = vsel %vm305, %v620, 0.0
        %v629 = vrot.slane %v628, 4
        %v630 = vadd.f32 %v628, %v629
        %v631 = vrot.slane %v630, 2
        %v632 = vadd.f32 %v630, %v631
        %v633 = vrot.slane %v632, 1
        %v634 = vadd.f32 %v632, %v633
        %v637 = vrot.slane %v514, 6
        %v638 = vrot.slane %v515, 6
        %v641 = vsub.f32 %v512, %v637
        %v642 = vsub.f32 %v513, %v638
        %v643 = vand.u32 2147483647, %v641
        %v644 = vand.u32 2147483647, %v642
        %vm645 = vcmp.lt.f32.partialorder %v643, 1.0
        %vm646 = vcmp.lt.f32.partialorder %v644, 1.0
        %v647 = vmul.f32 %v641, 0.5
        %v648 = vmul.f32 %v642, 0.5
        %v649 = vmul.f32 %v647, %v641
        %v650 = vmul.f32 %v648, %v642
        %v651 = vsub.f32 %v643, 0.5
        %v652 = vsub.f32 %v644, 0.5
        %v653 = vsel %vm645, %v649, %v651
        %v654 = vsel %vm646, %v650, %v652
        %v655 = vrot.slane %v514, 2
        %v656 = vrot.slane %v515, 2
        %v659 = vsub.f32 %v512, %v655
        %v660 = vsub.f32 %v513, %v656
        %v661 = vand.u32 2147483647, %v659
        %v662 = vand.u32 2147483647, %v660
        %vm663 = vcmp.lt.f32.partialorder %v661, 1.0
        %vm664 = vcmp.lt.f32.partialorder %v662, 1.0
        %v665 = vmul.f32 %v659, 0.5
        %v666 = vmul.f32 %v660, 0.5
        %v667 = vmul.f32 %v665, %v659
        %v668 = vmul.f32 %v666, %v660
        %v669 = vsub.f32 %v661, 0.5
        %v670 = vsub.f32 %v662, 0.5
        %v671 = vsel %vm663, %v667, %v669
        %v672 = vsel %vm664, %v668, %v670
        %v675 = vrot.slane %v671, 6
        %v676 = vrot.slane %v672, 6
        %v679 = vadd.f32 %v653, %v675
        %v680 = vadd.f32 %v654, %v676
        %v683 = vrot.slane %v679, 2
        %v684 = vrot.slane %v680, 2
        %v687 = vsel %vm305, %v683, 0.0
        %v688 = vrot.slane %v687, 4
        %v689 = vadd.f32 %v687, %v688
        %v690 = vrot.slane %v689, 2
        %v691 = vadd.f32 %v689, %v690
        %v692 = vrot.slane %v691, 1
        %v693 = vadd.f32 %v691, %v692
        %v694 = vsel %vm305, %v684, 0.0
        %v695 = vrot.slane %v694, 4
        %v696 = vadd.f32 %v694, %v695
        %v697 = vrot.slane %v696, 2
        %v698 = vadd.f32 %v696, %v697
        %v699 = vrot.slane %v698, 1
        %v700 = vadd.f32 %v698, %v699
        %v701 = vmin.f32 %v627, %v693
        %v702 = vmin.f32 %v634, %v700
        %v703 = vmul.f32 %v701, %v597
        %v704 = vmul.f32 %v702, %v598
        %v705 = vadd.f32 %v703, %v704
        %706 = vadd.xlane.f32.xlu0 %v705
        %v707 = vpop.xlane.xlu0 %706
        %v708 = vadd.f32 %v597, %v598
        %709 = vadd.xlane.f32.xlu0 %v708
        %v710 = vpop.xlane.xlu0 %709
        %v711 = vxor.u32 %v512, 2147483648
        %v712 = vxor.u32 %v513, 2147483648
        %v713 = vmul.f32 %v711, 1.442695
        %v714 = vpow.pop %v713
        %v715 = vmul.f32 %v712, 1.442695
        %v716 = vpow.pop %v715
        %v717 = vadd.f32 %v714, 1.0
        %v718 = vadd.f32 %v716, 1.0
        %v719 = vrcp.pop %v717
        %v720 = vmul.f32 1.0, %v719
        %v721 = vrcp.pop %v718
        %v722 = vmul.f32 1.0, %v721
        %v723 = vsub.f32 %v720, %v514
        %v724 = vsub.f32 %v722, %v515
        %v725 = vand.u32 2147483647, %v723
        %v726 = vand.u32 2147483647, %v724
        %vm727 = vcmp.lt.f32.partialorder %v725, 1.0
        %vm728 = vcmp.lt.f32.partialorder %v726, 1.0
        %v729 = vmul.f32 %v723, 0.5
        %v730 = vmul.f32 %v724, 0.5
        %v731 = vmul.f32 %v729, %v723
        %v732 = vmul.f32 %v730, %v724
        %v733 = vsub.f32 %v725, 0.5
        %v734 = vsub.f32 %v726, 0.5
        %v735 = vsel %vm727, %v731, %v733
        %v736 = vsel %vm728, %v732, %v734
        %v737 = vlaneseq
        %v738 = vshrl.u32 %v737, 7
        %v739 = vsub.s32 4, %v738
        %v740 = vrot.slane %v520, %v739
        %v741 = vlaneseq
        %v742 = vshrl.u32 %v741, 7
        %v743 = vsub.s32 4, %v742
        %v744 = vrot.slane %v521, %v743
        %v745 = vmul.f32 %v735, %v740
        %v746 = vmul.f32 %v736, %v744
        %vm747 = vcmask 1045508
        %v748 = vsel %vm747, %v745, 0.0
        %v749 = vsel %vm747, %v746, 0.0
        %v750 = vadd.f32 %v748, %v749
        %751 = vadd.xlane.f32.xlu0 %v750
        %v752 = vpop.xlane.xlu0 %751
        %v754 = vrot.slane %v752, 2
        %v756 = vsel %vm509, %v707, %v710
        %v757 = vsel %vm305, %v756, %v754
        %v758 = vld [vmem:[#allocation2] sm:$0xff]
        %v759 = vadd.f32 %v758, %v290
        %vm760 = vcmask 7168
        %761 = vst.msk [vmem:[#allocation2] sm:$0xff] %vm760, %v759
        %v762 = vld [vmem:[#allocation3] sm:$0xff]
        %v763 = vadd.f32 %v762, %v293
        %764 = vst.msk [vmem:[#allocation3] sm:$0xff] %vm760, %v763
        %v765 = vld [vmem:[#allocation4] sm:$0xff]
        %v766 = vadd.f32 %v765, %v296
        %767 = vst.msk [vmem:[#allocation4] sm:$0xff] %vm760, %v766
        %v768 = vld [vmem:[#allocation5] sm:$0xf]
        %v769 = vadd.f32 %v768, %v511
        %vm770 = vcmask 3072
        %771 = vst.msk [vmem:[#allocation5] sm:$0xf] %vm770, %v769
        %v772 = vld [vmem:[#allocation6] sm:$0xff]
        %v773 = vadd.f32 %v772, %v548
        %774 = vst.msk [vmem:[#allocation6] sm:$0xff] %vm760, %v773
        %v775 = vld [vmem:[#allocation7] sm:$0xff]
        %v776 = vadd.f32 %v775, %v551
        %777 = vst.msk [vmem:[#allocation7] sm:$0xff] %vm760, %v776
        %v778 = vld [vmem:[#allocation8] sm:$0xff]
        %v779 = vadd.f32 %v778, %v554
        %780 = vst.msk [vmem:[#allocation8] sm:$0xff] %vm760, %v779
        %v781 = vld [vmem:[#allocation9] sm:$0xf]
        %v782 = vadd.f32 %v781, %v757
        %783 = vst.msk [vmem:[#allocation9] sm:$0xf] %vm770, %v782
        // Predicated region
        $region41: #{tpu_custom_call.1} parent=27 // pred_check
          %p784 = pneg %p240
        $region42: #{tpu_custom_call.1} parent=27 // pred_check_branch
          %786 = sbr.rel (%p784) target = $region44
        $region43: #{tpu_custom_call.1} parent=27 // pred_region
          %v787 = vld [vmem:[#allocation2] sm:$0x1]
          %v788 = vld [vmem:[#allocation3] sm:$0x1]
          %v789 = vld [vmem:[#allocation4] sm:$0x1]
          %v790 = vld [vmem:[#allocation2 + $0x7] sm:$0x1]
          %v791 = vld [vmem:[#allocation3 + $0x7] sm:$0x1]
          %v792 = vld [vmem:[#allocation4 + $0x7] sm:$0x1]
          %v793 = vld [vmem:[#allocation5] sm:$0x1]
          %v794 = vld [vmem:[#allocation5 + $0x1] sm:$0x1]
          %v795 = vld [vmem:[#allocation5 + $0x2] sm:$0x1]
          %v796 = vld [vmem:[#allocation5 + $0x3] sm:$0x1]
          %v797 = vld [vmem:[#allocation3 + $0x5] sm:$0x1]
          %v798 = vld [vmem:[#allocation6 + $0x6] sm:$0x1]
          %v799 = vld [vmem:[#allocation7 + $0x6] sm:$0x1]
          %v800 = vld [vmem:[#allocation8 + $0x6] sm:$0x1]
          %v801 = vld [vmem:[#allocation6 + $0x7] sm:$0x1]
          %v802 = vld [vmem:[#allocation7 + $0x7] sm:$0x1]
          %v803 = vld [vmem:[#allocation8 + $0x7] sm:$0x1]
          %v804 = vld [vmem:[#allocation9] sm:$0x1]
          %v805 = vld [vmem:[#allocation9 + $0x1] sm:$0x1]
          %v806 = vld [vmem:[#allocation9 + $0x2] sm:$0x1]
          %v807 = vld [vmem:[#allocation9 + $0x3] sm:$0x1]
          %v808 = vld [vmem:[#allocation7 + $0x4] sm:$0x1]
          %v809 = vlaneseq
          %v810 = vand.u32 %v809, 127
          %vm811 = vcmp.eq.s32.totalorder %v810, 0
          %813 = vset.pattern.permute.xlu0 0
          %814 = vperm.xlu0 %813, %v787
          %v815 = vpop.permute.xlu0 %814
          %v817 = vsel %vm811, %v815, 0.0
          %v818 = vadd.f32 %v817, 0.0
          %vm819 = vcmp.eq.s32.totalorder %v810, 1
          %821 = vset.pattern.permute.xlu0 0
          %822 = vperm.xlu0 %821, %v788
          %v823 = vpop.permute.xlu0 %822
          %v825 = vsel %vm819, %v823, 0.0
          %v826 = vadd.f32 %v818, %v825
          %vm827 = vcmp.eq.s32.totalorder %v810, 2
          %829 = vset.pattern.permute.xlu0 0
          %830 = vperm.xlu0 %829, %v789
          %v831 = vpop.permute.xlu0 %830
          %v833 = vsel %vm827, %v831, 0.0
          %v834 = vadd.f32 %v826, %v833
          %vm835 = vcmp.eq.s32.totalorder %v810, 3
          %837 = vset.pattern.permute.xlu0 0
          %838 = vperm.xlu0 %837, %v790
          %v839 = vpop.permute.xlu0 %838
          %v841 = vsel %vm835, %v839, 0.0
          %v842 = vadd.f32 %v834, %v841
          %vm843 = vcmp.eq.s32.totalorder %v810, 4
          %845 = vset.pattern.permute.xlu0 0
          %846 = vperm.xlu0 %845, %v791
          %v847 = vpop.permute.xlu0 %846
          %v849 = vsel %vm843, %v847, 0.0
          %v850 = vadd.f32 %v842, %v849
          %vm851 = vcmp.eq.s32.totalorder %v810, 5
          %853 = vset.pattern.permute.xlu0 0
          %854 = vperm.xlu0 %853, %v792
          %v855 = vpop.permute.xlu0 %854
          %v857 = vsel %vm851, %v855, 0.0
          %v858 = vadd.f32 %v850, %v857
          %vm859 = vcmp.eq.s32.totalorder %v810, 6
          %861 = vset.pattern.permute.xlu0 0
          %862 = vperm.xlu0 %861, %v793
          %v863 = vpop.permute.xlu0 %862
          %v865 = vsel %vm859, %v863, 0.0
          %v866 = vadd.f32 %v858, %v865
          %vm867 = vcmp.eq.s32.totalorder %v810, 7
          %869 = vset.pattern.permute.xlu0 0
          %870 = vperm.xlu0 %869, %v794
          %v871 = vpop.permute.xlu0 %870
          %v873 = vsel %vm867, %v871, 0.0
          %v874 = vadd.f32 %v866, %v873
          %vm875 = vcmp.eq.s32.totalorder %v810, 8
          %877 = vset.pattern.permute.xlu0 0
          %878 = vperm.xlu0 %877, %v795
          %v879 = vpop.permute.xlu0 %878
          %v881 = vsel %vm875, %v879, 0.0
          %v882 = vadd.f32 %v874, %v881
          %vm883 = vcmp.eq.s32.totalorder %v810, 9
          %885 = vset.pattern.permute.xlu0 0
          %886 = vperm.xlu0 %885, %v796
          %v887 = vpop.permute.xlu0 %886
          %v889 = vsel %vm883, %v887, 0.0
          %v890 = vadd.f32 %v882, %v889
          %vm891 = vcmp.eq.s32.totalorder %v810, 10
          %893 = vset.pattern.permute.xlu0 0
          %894 = vperm.xlu0 %893, %v797
          %v895 = vpop.permute.xlu0 %894
          %v897 = vsel %vm891, %v895, 0.0
          %v898 = vadd.f32 %v890, %v897
          %vm899 = vcmp.eq.s32.totalorder %v810, 11
          %901 = vset.pattern.permute.xlu0 0
          %902 = vperm.xlu0 %901, %v798
          %v903 = vpop.permute.xlu0 %902
          %v905 = vsel %vm899, %v903, 0.0
          %v906 = vadd.f32 %v898, %v905
          %vm907 = vcmp.eq.s32.totalorder %v810, 12
          %909 = vset.pattern.permute.xlu0 0
          %910 = vperm.xlu0 %909, %v799
          %v911 = vpop.permute.xlu0 %910
          %v913 = vsel %vm907, %v911, 0.0
          %v914 = vadd.f32 %v906, %v913
          %vm915 = vcmp.eq.s32.totalorder %v810, 13
          %917 = vset.pattern.permute.xlu0 0
          %918 = vperm.xlu0 %917, %v800
          %v919 = vpop.permute.xlu0 %918
          %v921 = vsel %vm915, %v919, 0.0
          %v922 = vadd.f32 %v914, %v921
          %vm923 = vcmp.eq.s32.totalorder %v810, 14
          %925 = vset.pattern.permute.xlu0 0
          %926 = vperm.xlu0 %925, %v801
          %v927 = vpop.permute.xlu0 %926
          %v929 = vsel %vm923, %v927, 0.0
          %v930 = vadd.f32 %v922, %v929
          %vm931 = vcmp.eq.s32.totalorder %v810, 15
          %933 = vset.pattern.permute.xlu0 0
          %934 = vperm.xlu0 %933, %v802
          %v935 = vpop.permute.xlu0 %934
          %v937 = vsel %vm931, %v935, 0.0
          %v938 = vadd.f32 %v930, %v937
          %vm939 = vcmp.eq.s32.totalorder %v810, 16
          %941 = vset.pattern.permute.xlu0 0
          %942 = vperm.xlu0 %941, %v803
          %v943 = vpop.permute.xlu0 %942
          %v945 = vsel %vm939, %v943, 0.0
          %v946 = vadd.f32 %v938, %v945
          %vm947 = vcmp.eq.s32.totalorder %v810, 17
          %949 = vset.pattern.permute.xlu0 0
          %950 = vperm.xlu0 %949, %v804
          %v951 = vpop.permute.xlu0 %950
          %v953 = vsel %vm947, %v951, 0.0
          %v954 = vadd.f32 %v946, %v953
          %vm955 = vcmp.eq.s32.totalorder %v810, 18
          %957 = vset.pattern.permute.xlu0 0
          %958 = vperm.xlu0 %957, %v805
          %v959 = vpop.permute.xlu0 %958
          %v961 = vsel %vm955, %v959, 0.0
          %v962 = vadd.f32 %v954, %v961
          %vm963 = vcmp.eq.s32.totalorder %v810, 19
          %965 = vset.pattern.permute.xlu0 0
          %966 = vperm.xlu0 %965, %v806
          %v967 = vpop.permute.xlu0 %966
          %v969 = vsel %vm963, %v967, 0.0
          %v970 = vadd.f32 %v962, %v969
          %vm971 = vcmp.eq.s32.totalorder %v810, 20
          %973 = vset.pattern.permute.xlu0 0
          %974 = vperm.xlu0 %973, %v807
          %v975 = vpop.permute.xlu0 %974
          %v977 = vsel %vm971, %v975, 0.0
          %v978 = vadd.f32 %v970, %v977
          %vm979 = vcmp.eq.s32.totalorder %v810, 21
          %981 = vset.pattern.permute.xlu0 0
          %982 = vperm.xlu0 %981, %v808
          %v983 = vpop.permute.xlu0 %982
          %v985 = vsel %vm979, %v983, 0.0
          %v986 = vadd.f32 %v978, %v985
          %vm987 = vcmask 172032
          %988 = vst.msk [vmem:[%s235] sm:$0x1] %vm987, %v986
        $region44: #{tpu_custom_call.1} parent=27 // pred_fallthru
          _
        %s989 = sand.u32 %s111, 1
        %s990 = scalar_lea.sflag [#allocation12], %s989
        %s991 = sand.u32 %s111, 1
        %s992 = scalar_lea.vmem [#allocation15], %s991
        // Predicated region
        $region45: #{tpu_custom_call.1} parent=27 // pred_check
          %p993 = pneg %p121
        $region46: #{tpu_custom_call.1} parent=27 // pred_check_branch
          %995 = sbr.rel (%p993) target = $region48
        $region47: #{tpu_custom_call.1} parent=27 // pred_region
          %s997 = ssub.s32 16, 16
          %998 = vsyncadd %s990, %s997
          %s999 = smul.addr %s27, 2
          %s1000 = sadd.s32 %s28, %s999
          %s1001 = smul.addr %s1000, 16
          %s1002 = scalar_lea.hbm %s2, %s1001
          %s1004 = sshll.u32 %s992, 4
          %s1005 = int_to_ptr.vmem [resolvable:$true] %s1004
          %1007 = dma.vmem_to_hbm [thread:$0]  %s1005, 16, %s1002, %s990
        $region48: #{tpu_custom_call.1} parent=27 // pred_fallthru
          _
      $region28: #{tpu_custom_call.1} parent=5 // pred_fallthru
        _
      %p1008 = scmp.le.s32.totalorder 2, %s17
      // Predicated region
      $region49: #{tpu_custom_call.1} parent=5 // pred_check
        %p1009 = pneg %p1008
      $region50: #{tpu_custom_call.1} parent=5 // pred_check_branch
        %1011 = sbr.rel (%p1009) target = $region52
      $region51: #{tpu_custom_call.1} parent=5 // pred_region
        %s1012 = ssub.s32 %s17, 2
        // Predicated region
        $region53: #{tpu_custom_call.1} parent=51 // pred_check
          %p1013 = pneg %p127
        $region54: #{tpu_custom_call.1} parent=51 // pred_check_branch
          %1015 = sbr.rel (%p1013) target = $region56
        $region55: #{tpu_custom_call.1} parent=51 // pred_region
          %s1016 = sand.u32 %s112, 1
          %s1017 = scalar_lea.sflag [#allocation12], %s1016
          %s1018 = sand.u32 %s112, 1
          %s1019 = scalar_lea.vmem [#allocation15], %s1018
          %1020 = dma.done %s1017, 16
        $region56: #{tpu_custom_call.1} parent=51 // pred_fallthru
          _
      $region52: #{tpu_custom_call.1} parent=5 // pred_fallthru
        _
    $region6: #{tpu_custom_call.1} parent=1 // loop_footer
      %s21 = sadd.s32 1, %s17
    $region7: #{tpu_custom_call.1} parent=1 // loop_footer_branch
      %16 = sbr.rel target = $region3
    $region8: #{tpu_custom_call.1} parent=1 // loop_exit
      _
    %1021 = vsyncpa [#allocation11], 1
    %s1022 = scalar_lea.sflag [#allocation11], 1
    %1023 = vsyncpa %s1022, 1
    %1024 = vsyncpa [#allocation14], 1
    %s1025 = scalar_lea.sflag [#allocation14], 1
    %1026 = vsyncpa %s1025, 1
    %1027 = vsyncpa [#allocation12], 1
    %s1028 = scalar_lea.sflag [#allocation12], 1
    %1029 = vsyncpa %s1028, 1

</llo_original>
